<compile_context>
chip_gen: v7x
topology: tpu7x:2x2x1
jax: 0.10.0
libtpu: 0.0.40
codegen_flags: <defaults>
</compile_context>

<pallas_src>
import functools

import jax
import jax.numpy as jnp
from jax.experimental import pallas as pl
from jax.experimental.pallas import tpu as pltpu

NUM_ENC = 2        # attn_layer output dim (= number of encoder positions) in the module
ATTN_PAD = 128     # lane-dense width for the attention softmax / output
NEG = -1e30        # "minus infinity" for softmax padding (finite, f32-safe)


def _round_up(x, m):
    return ((x + m - 1) // m) * m


# ----------------------------------------------------------------------------
# Kernel 1: embedding-fed attention + attn_combine + single GRU step (runs once)
# ----------------------------------------------------------------------------
def decoder_prologue_kernel(emb_ref, h_ref, enc_ref,
                            attn_we_ref, attn_wh_ref, attn_b_ref,
                            comb_we_ref, comb_wa_ref, comb_b_ref,
                            w_ih_ref, b_ih_ref, w_hh_ref, b_hh_ref,
                            h_out_ref, attnw_ref):
    H = h_ref.shape[1]
    emb = emb_ref[...]                                  # (bs, H)
    h = h_ref[...]                                      # (bs, H)
    enc = enc_ref[...]                                  # (bs, 2, H)

    # --- attention over the 2 encoder positions (lane-dense, NEG-padded) -----
    a_logits = (jnp.dot(emb, attn_we_ref[...], preferred_element_type=jnp.float32)
                + jnp.dot(h, attn_wh_ref[...], preferred_element_type=jnp.float32)
                + attn_b_ref[...])                      # (bs, 128); pad lanes ~ -1e30
    a_max = jnp.max(a_logits, axis=-1, keepdims=True)
    a_exp = jnp.exp(a_logits - a_max)
    a_den = jnp.sum(a_exp, axis=-1, keepdims=True)
    attn = a_exp / a_den                                # exact divide: user-visible output
    attnw_ref[...] = attn

    # bmm (bs,1,2) x (bs,2,H) unrolled over the 2 encoder positions
    applied = attn[:, 0:1] * enc[:, 0, :] + attn[:, 1:2] * enc[:, 1, :]   # (bs, H)

    # --- attn_combine + relu (concat eliminated: split weights) --------------
    comb = (jnp.dot(emb, comb_we_ref[...], preferred_element_type=jnp.float32)
            + jnp.dot(applied, comb_wa_ref[...], preferred_element_type=jnp.float32)
            + comb_b_ref[...])
    comb = jnp.maximum(comb, 0.0)                       # (bs, H)

    # --- single-step GRU, fused gate matmuls (r|z|n along lanes, zero-padded) -
    gi = jnp.dot(comb, w_ih_ref[...], preferred_element_type=jnp.float32) + b_ih_ref[...]
    gh = jnp.dot(h, w_hh_ref[...], preferred_element_type=jnp.float32) + b_hh_ref[...]
    r = jax.nn.sigmoid(gi[:, 0:H] + gh[:, 0:H])
    z = jax.nn.sigmoid(gi[:, H:2 * H] + gh[:, H:2 * H])
    n = jnp.tanh(gi[:, 2 * H:3 * H] + r * gh[:, 2 * H:3 * H])
    h_out_ref[...] = (1.0 - z) * n + z * h              # (bs, H)


# ----------------------------------------------------------------------------
# Kernel 2: output projection over vocab tiles + per-tile log-sum-exp partials
# ----------------------------------------------------------------------------
def vocab_logsoftmax_kernel(h_ref, out_wt_ref, out_b_ref,
                            logits_ref, pmax_ref, psum_ref):
    h = h_ref[...]                                      # (bs, H) f32
    # bf16 weights are streamed from HBM (half the bytes); accumulate in f32.
    wt = out_wt_ref[...].astype(jnp.float32)            # (H, V_TILE)
    logits = jnp.dot(h, wt, preferred_element_type=jnp.float32) + out_b_ref[...]
    logits_ref[...] = logits                            # lane-dense per-tile writeback
    m = jnp.max(logits, axis=-1, keepdims=True)         # (bs, 1)
    pmax_ref[0] = m
    psum_ref[0] = jnp.sum(jnp.exp(logits - m), axis=-1, keepdims=True)


# ----------------------------------------------------------------------------
# One-time host-side weight preparation
# ----------------------------------------------------------------------------
def prepare_decoder_params(params, v_tile=None, vmem_budget_bytes=8 << 20):
    """Transpose / split / pad / cast all weights once (off the hot path)."""
    V, H = params["w_emb"].shape

    # attention layer: split cat([emb, h]) weight, pad the 2-wide output to 128 lanes
    attn_w = params["attn_w"]                                        # (2, 2H)
    attn_we = jnp.zeros((H, ATTN_PAD), jnp.float32).at[:, :NUM_ENC].set(attn_w[:, :H].T)
    attn_wh = jnp.zeros((H, ATTN_PAD), jnp.float32).at[:, :NUM_ENC].set(attn_w[:, H:].T)
    attn_b = jnp.full((1, ATTN_PAD), NEG, jnp.float32).at[0, :NUM_ENC].set(params["attn_b"])

    # attn_combine layer: split cat([emb, attn_applied]) weight
    comb_w = params["comb_w"]                                        # (H, 2H)
    comb_we = comb_w[:, :H].T                                        # (H, H)
    comb_wa = comb_w[:, H:].T                                        # (H, H)
    comb_b = params["comb_b"].reshape(1, H)

    # GRU weights: fused (r|z|n) along the lane axis, pre-transposed, lane-padded
    gate_pad = _round_up(3 * H, 128)
    w_ih = jnp.zeros((H, gate_pad), jnp.float32).at[:, :3 * H].set(params["w_ih"].T)
    w_hh = jnp.zeros((H, gate_pad), jnp.float32).at[:, :3 * H].set(params["w_hh"].T)
    b_ih = jnp.zeros((1, gate_pad), jnp.float32).at[0, :3 * H].set(params["b_ih"])
    b_hh = jnp.zeros((1, gate_pad), jnp.float32).at[0, :3 * H].set(params["b_hh"])

    # output projection: pre-transposed, streamed in bf16, vocab padded to a
    # multiple of v_tile.  v_tile sized so 2 buffers x 2 B x H x v_tile stays well
    # under the scoped-VMEM budget (conservative for v7x's 64 MiB VMEM).
    if v_tile is None:
        v_tile = min(8192, max(128, (vmem_budget_bytes // (2 * 2 * H)) // 128 * 128))
    v_tile = int(min(v_tile, _round_up(V, 128)))
    Vp = _round_up(V, v_tile)
    out_wt = jnp.zeros((H, Vp), jnp.bfloat16).at[:, :V].set(
        params["out_w"].T.astype(jnp.bfloat16))
    out_b = jnp.full((1, Vp), NEG, jnp.float32).at[0, :V].set(params["out_b"])

    return {
        "emb": params["w_emb"],        # f32; rows gathered in the wrapper (XLA gather)
        "attn_we": attn_we, "attn_wh": attn_wh, "attn_b": attn_b,
        "comb_we": comb_we, "comb_wa": comb_wa, "comb_b": comb_b,
        "w_ih": w_ih, "b_ih": b_ih, "w_hh": w_hh, "b_hh": b_hh,
        "out_wt": out_wt, "out_b": out_b,
        "v_tile": v_tile,              # static metadata (popped before jit)
    }


# ----------------------------------------------------------------------------
# Forward wrapper
# ----------------------------------------------------------------------------
@functools.partial(jax.jit, static_argnames=("v_tile",))
def _decoder_rnn_forward_impl(w, inputs, hidden, encoder_outputs, *, v_tile):
    bs = inputs.shape[1]
    V, H = w["emb"].shape
    Vp = w["out_wt"].shape[1]
    nv = Vp // v_tile

    # Embedding gather in the wrapper: at small bs, per-row in-kernel DMAs are pure
    # descriptor latency serialized at the front of the kernel.
    # NOTE: OOB ids are clamped (PyTorch's nn.Embedding would raise instead).
    ids = jnp.clip(inputs.reshape(bs).astype(jnp.int32), 0, V - 1)
    emb = w["emb"][ids]                                 # (bs, H) f32
    h = hidden.reshape(bs, H)

    # ---- kernel 1: attention + combine + GRU step (runs once) ---------------
    h_new, attn_pad = pl.pallas_call(
        decoder_prologue_kernel,
        grid_spec=pltpu.PrefetchScalarGridSpec(
            num_scalar_prefetch=0,
            grid=(1,),
            in_specs=[
                pl.BlockSpec((bs, H), lambda i: (0, 0)),              # embeddings
                pl.BlockSpec((bs, H), lambda i: (0, 0)),              # hidden
                pl.BlockSpec((bs, NUM_ENC, H), lambda i: (0, 0, 0)),  # encoder outputs
                pl.BlockSpec((H, ATTN_PAD), lambda i: (0, 0)),        # attn W (emb half)
                pl.BlockSpec((H, ATTN_PAD), lambda i: (0, 0)),        # attn W (h half)
                pl.BlockSpec((1, ATTN_PAD), lambda i: (0, 0)),        # attn b (NEG-padded)
                pl.BlockSpec((H, H), lambda i: (0, 0)),               # combine W (emb half)
                pl.BlockSpec((H, H), lambda i: (0, 0)),               # combine W (attn half)
                pl.BlockSpec((1, H), lambda i: (0, 0)),               # combine b
                pl.BlockSpec(w["w_ih"].shape, lambda i: (0, 0)),      # fused GRU W_ih
                pl.BlockSpec(w["b_ih"].shape, lambda i: (0, 0)),      # fused GRU b_ih
                pl.BlockSpec(w["w_hh"].shape, lambda i: (0, 0)),      # fused GRU W_hh
                pl.BlockSpec(w["b_hh"].shape, lambda i: (0, 0)),      # fused GRU b_hh
            ],
            out_specs=(
                pl.BlockSpec((bs, H), lambda i: (0, 0)),              # new hidden
                pl.BlockSpec((bs, ATTN_PAD), lambda i: (0, 0)),       # attn weights (padded)
            ),
        ),
        out_shape=(
            jax.ShapeDtypeStruct((bs, H), jnp.float32),
            jax.ShapeDtypeStruct((bs, ATTN_PAD), jnp.float32),
        ),
        compiler_params=pltpu.CompilerParams(dimension_semantics=("arbitrary",)),
    )(emb, h, encoder_outputs,
      w["attn_we"], w["attn_wh"], w["attn_b"],
      w["comb_we"], w["comb_wa"], w["comb_b"],
      w["w_ih"], w["b_ih"], w["w_hh"], w["b_hh"])

    # ---- kernel 2: streamed output projection + per-tile LSE partials -------
    logits_p, pmax, psum = pl.pallas_call(
        vocab_logsoftmax_kernel,
        grid_spec=pltpu.PrefetchScalarGridSpec(
            num_scalar_prefetch=0,
            grid=(nv,),
            in_specs=[
                pl.BlockSpec((bs, H), lambda v: (0, 0)),              # new hidden
                pl.BlockSpec((H, v_tile), lambda v: (0, v)),          # bf16 out_w^T tile
                pl.BlockSpec((1, v_tile), lambda v: (0, v)),          # out_b tile (f32)
            ],
            out_specs=(
                pl.BlockSpec((bs, v_tile), lambda v: (0, v)),         # lane-dense logits
                pl.BlockSpec((1, bs, 1), lambda v: (v, 0, 0)),        # per-tile max
                pl.BlockSpec((1, bs, 1), lambda v: (v, 0, 0)),        # per-tile sum-exp
            ),
        ),
        out_shape=(
            jax.ShapeDtypeStruct((bs, Vp), jnp.float32),
            jax.ShapeDtypeStruct((nv, bs, 1), jnp.float32),
            jax.ShapeDtypeStruct((nv, bs, 1), jnp.float32),
        ),
        # No cross-tile carry -> vocab axis is truly parallel (2-TC split on v7x).
        compiler_params=pltpu.CompilerParams(dimension_semantics=("parallel",)),
    )(h_new, w["out_wt"], w["out_b"])

    # Combine the per-tile partials into the global log-sum-exp and normalize.
    m_glob = jnp.max(pmax, axis=0)                                    # (bs, 1)
    lse = m_glob + jnp.log(jnp.sum(psum * jnp.exp(pmax - m_glob), axis=0))

    output = (logits_p[:, :V] - lse).reshape(bs, 1, V)                # log-probs
    hidden_out = h_new.reshape(1, bs, H)
    attn_weights = attn_pad[:, :NUM_ENC].reshape(bs, 1, NUM_ENC)
    return output, hidden_out, attn_weights


def decoder_rnn_forward(prepped, inputs, hidden, encoder_outputs):
    """inputs: (1, bs) int32, hidden: (1, bs, H), encoder_outputs: (bs, 2, H)."""
    weights = {k: v for k, v in prepped.items() if k != "v_tile"}
    return _decoder_rnn_forward_impl(weights, inputs, hidden, encoder_outputs,
                                     v_tile=prepped["v_tile"])


# ----------------------------------------------------------------------------
# Pure-JAX reference of the PyTorch forward (eval mode) + param construction
# ----------------------------------------------------------------------------
def decoder_rnn_reference(params, inputs, hidden, encoder_outputs):
    bs = inputs.shape[1]
    V, H = params["w_emb"].shape
    emb = params["w_emb"][inputs.reshape(-1)]                         # (bs, H)
    h = hidden.reshape(bs, H)
    cat1 = jnp.concatenate([emb, h], -1)
    aw = jax.nn.softmax(cat1 @ params["attn_w"].T + params["attn_b"], -1)   # (bs, 2)
    applied = jnp.einsum('bk,bkh->bh', aw, encoder_outputs)
    cat2 = jnp.concatenate([emb, applied], -1)
    comb = jax.nn.relu(cat2 @ params["comb_w"].T + params["comb_b"])
    gi = comb @ params["w_ih"].T + params["b_ih"]
    gh = h @ params["w_hh"].T + params["b_hh"]
    r = jax.nn.sigmoid(gi[:, :H] + gh[:, :H])
    z = jax.nn.sigmoid(gi[:, H:2 * H] + gh[:, H:2 * H])
    n = jnp.tanh(gi[:, 2 * H:] + r * gh[:, 2 * H:])
    h_new = (1.0 - z) * n + z * h
    logp = jax.nn.log_softmax(h_new @ params["out_w"].T + params["out_b"], -1)
    return logp.reshape(bs, 1, V), h_new.reshape(1, bs, H), aw.reshape(bs, 1, 2)


def make_params(key, vocab_size, hidden_size):
    ks = jax.random.split(key, 10)
    H, V = hidden_size, vocab_size
    s = 0.1
    return {
        "w_emb":  jax.random.normal(ks[0], (V, H), jnp.float32) * s,
        "attn_w": jax.random.normal(ks[1], (2, 2 * H), jnp.float32) * s,
        "attn_b": jax.random.normal(ks[2], (2,), jnp.float32) * s,
        "comb_w": jax.random.normal(ks[3], (H, 2 * H), jnp.float32) * s,
        "comb_b": jax.random.normal(ks[4], (H,), jnp.float32) * s,
        "w_ih":   jax.random.normal(ks[5], (3 * H, H), jnp.float32) * s,
        "b_ih":   jax.random.normal(ks[6], (3 * H,), jnp.float32) * s,
        "w_hh":   jax.random.normal(ks[7], (3 * H, H), jnp.float32) * s,
        "b_hh":   jax.random.normal(ks[8], (3 * H,), jnp.float32) * s,
        "out_w":  jax.random.normal(ks[9], (V, H), jnp.float32) * s,
        "out_b":  jnp.zeros((V,), jnp.float32),
    }


if __name__ == "__main__":
    VOCAB = 4000   # not a multiple of the tile -> exercises vocab padding
    HIDDEN = 32
    BS = 2

    key = jax.random.PRNGKey(0)
    kp, ki, kh, ke = jax.random.split(key, 4)
    params = make_params(kp, VOCAB, HIDDEN)
    # v_tile=1024 keeps several vocab tiles at this toy size so the parallel
    # multi-tile / partial-LSE path is exercised; the auto default would pick a
    # single large tile for a vocab this small.
    prepped = prepare_decoder_params(params, v_tile=1024)

    inputs = jax.random.randint(ki, (1, BS), 0, VOCAB, dtype=jnp.int32)       # (1, bs)
    hidden = jax.random.normal(kh, (1, BS, HIDDEN), jnp.float32)              # (1, bs, H)
    encoder_outputs = jax.random.normal(ke, (BS, NUM_ENC, HIDDEN), jnp.float32)

    out, h_out, attn_w = decoder_rnn_forward(prepped, inputs, hidden, encoder_outputs)
    jax.block_until_ready((out, h_out, attn_w))

    ref_out, ref_h, ref_aw = decoder_rnn_reference(params, inputs, hidden, encoder_outputs)
    assert out.shape == (BS, 1, VOCAB)
    assert h_out.shape == (1, BS, HIDDEN)
    assert attn_w.shape == (BS, 1, NUM_ENC)
    # prologue is exact f32 now (no approx reciprocal): tight tolerances
    assert jnp.allclose(attn_w, ref_aw, atol=1e-4), "attention weights mismatch"
    assert jnp.allclose(h_out, ref_h, atol=1e-4), "hidden state mismatch"
    # out_w is streamed in bf16 (f32 accumulation) -> ~1e-3-level logit differences
    assert jnp.allclose(out, ref_out, atol=5e-3), "log-softmax output mismatch"

    print("KERNEL_OK")
</pallas_src>

<mosaic_0001>
module attributes {stable_mosaic.version = 11 : i64} {
  func.func @decoder_prologue_kernel(%arg0: i32, %arg1: memref<2x32xf32, #tpu.memory_space<vmem>>, %arg2: memref<2x32xf32, #tpu.memory_space<vmem>>, %arg3: memref<2x2x32xf32, #tpu.memory_space<vmem>>, %arg4: memref<32x128xf32, #tpu.memory_space<vmem>>, %arg5: memref<32x128xf32, #tpu.memory_space<vmem>>, %arg6: memref<1x128xf32, #tpu.memory_space<vmem>>, %arg7: memref<32x32xf32, #tpu.memory_space<vmem>>, %arg8: memref<32x32xf32, #tpu.memory_space<vmem>>, %arg9: memref<1x32xf32, #tpu.memory_space<vmem>>, %arg10: memref<32x128xf32, #tpu.memory_space<vmem>>, %arg11: memref<1x128xf32, #tpu.memory_space<vmem>>, %arg12: memref<32x128xf32, #tpu.memory_space<vmem>>, %arg13: memref<1x128xf32, #tpu.memory_space<vmem>>, %arg14: memref<2x32xf32, #tpu.memory_space<vmem>>, %arg15: memref<2x128xf32, #tpu.memory_space<vmem>>) attributes {dimension_semantics = [#tpu.dimension_semantics<arbitrary>], iteration_bounds = array<i64: 1>, scalar_prefetch = 0 : i64, scratch_operands = 0 : i64, tpu.core_type = #tpu.core_type<tc>, window_params = [{pipeline_mode = #tpu.pipeline_mode<synchronous>, transform_indices = @transform_0, window_bounds = array<i64: 2, 32>}, {pipeline_mode = #tpu.pipeline_mode<synchronous>, transform_indices = @transform_1, window_bounds = array<i64: 2, 32>}, {pipeline_mode = #tpu.pipeline_mode<synchronous>, transform_indices = @transform_2, window_bounds = array<i64: 2, 2, 32>}, {pipeline_mode = #tpu.pipeline_mode<synchronous>, transform_indices = @transform_3, window_bounds = array<i64: 32, 128>}, {pipeline_mode = #tpu.pipeline_mode<synchronous>, transform_indices = @transform_4, window_bounds = array<i64: 32, 128>}, {pipeline_mode = #tpu.pipeline_mode<synchronous>, transform_indices = @transform_5, window_bounds = array<i64: 1, 128>}, {pipeline_mode = #tpu.pipeline_mode<synchronous>, transform_indices = @transform_6, window_bounds = array<i64: 32, 32>}, {pipeline_mode = #tpu.pipeline_mode<synchronous>, transform_indices = @transform_7, window_bounds = array<i64: 32, 32>}, {pipeline_mode = #tpu.pipeline_mode<synchronous>, transform_indices = @transform_8, window_bounds = array<i64: 1, 32>}, {pipeline_mode = #tpu.pipeline_mode<synchronous>, transform_indices = @transform_9, window_bounds = array<i64: 32, 128>}, {pipeline_mode = #tpu.pipeline_mode<synchronous>, transform_indices = @transform_10, window_bounds = array<i64: 1, 128>}, {pipeline_mode = #tpu.pipeline_mode<synchronous>, transform_indices = @transform_11, window_bounds = array<i64: 32, 128>}, {pipeline_mode = #tpu.pipeline_mode<synchronous>, transform_indices = @transform_12, window_bounds = array<i64: 1, 128>}, {pipeline_mode = #tpu.pipeline_mode<synchronous>, transform_indices = @transform_13, window_bounds = array<i64: 2, 32>}, {pipeline_mode = #tpu.pipeline_mode<synchronous>, transform_indices = @transform_14, window_bounds = array<i64: 2, 128>}]} {
    %c0 = arith.constant 0 : index
    %c0_0 = arith.constant 0 : index
    %0 = vector.load %arg1[%c0, %c0_0] : memref<2x32xf32, #tpu.memory_space<vmem>>, vector<2x32xf32>
    %c0_1 = arith.constant 0 : index
    %c0_2 = arith.constant 0 : index
    %1 = vector.load %arg2[%c0_1, %c0_2] : memref<2x32xf32, #tpu.memory_space<vmem>>, vector<2x32xf32>
    %c0_3 = arith.constant 0 : index
    %c0_4 = arith.constant 0 : index
    %c0_5 = arith.constant 0 : index
    %2 = vector.load %arg3[%c0_3, %c0_4, %c0_5] : memref<2x2x32xf32, #tpu.memory_space<vmem>>, vector<2x2x32xf32>
    %c0_6 = arith.constant 0 : index
    %c0_7 = arith.constant 0 : index
    %3 = vector.load %arg4[%c0_6, %c0_7] : memref<32x128xf32, #tpu.memory_space<vmem>>, vector<32x128xf32>
    %cst = arith.constant dense<0.000000e+00> : vector<2x128xf32>
    %4 = tpu.matmul %0, %3, %cst {dimension_numbers = #tpu.dot_dimension_numbers<[1], [0], [0], [1], [0, 0, 1, 1], [], []>} : vector<2x32xf32>, vector<32x128xf32>, vector<2x128xf32> -> vector<2x128xf32>
    %c0_8 = arith.constant 0 : index
    %c0_9 = arith.constant 0 : index
    %5 = vector.load %arg5[%c0_8, %c0_9] : memref<32x128xf32, #tpu.memory_space<vmem>>, vector<32x128xf32>
    %cst_10 = arith.constant dense<0.000000e+00> : vector<2x128xf32>
    %6 = tpu.matmul %1, %5, %cst_10 {dimension_numbers = #tpu.dot_dimension_numbers<[1], [0], [0], [1], [0, 0, 1, 1], [], []>} : vector<2x32xf32>, vector<32x128xf32>, vector<2x128xf32> -> vector<2x128xf32>
    %7 = arith.addf %4, %6 : vector<2x128xf32>
    %c0_11 = arith.constant 0 : index
    %c0_12 = arith.constant 0 : index
    %8 = vector.load %arg6[%c0_11, %c0_12] : memref<1x128xf32, #tpu.memory_space<vmem>>, vector<1x128xf32>
    %9 = vector.broadcast %8 : vector<1x128xf32> to vector<2x128xf32>
    %10 = arith.addf %7, %9 : vector<2x128xf32>
    %cst_13 = arith.constant dense<0xFF800000> : vector<2xf32>
    %11 = vector.multi_reduction <maximumf>, %10, %cst_13 [1] : vector<2x128xf32> to vector<2xf32>
    %12 = vector.shape_cast %11 : vector<2xf32> to vector<2x1xf32>
    %13 = vector.broadcast %12 : vector<2x1xf32> to vector<2x128xf32>
    %14 = arith.subf %10, %13 : vector<2x128xf32>
    %15 = math.exp %14 : vector<2x128xf32>
    %cst_14 = arith.constant dense<0.000000e+00> : vector<2xf32>
    %16 = vector.multi_reduction <add>, %15, %cst_14 [1] : vector<2x128xf32> to vector<2xf32>
    %17 = vector.shape_cast %16 : vector<2xf32> to vector<2x1xf32>
    %18 = vector.broadcast %17 : vector<2x1xf32> to vector<2x128xf32>
    %19 = arith.divf %15, %18 : vector<2x128xf32>
    %c0_15 = arith.constant 0 : index
    %c0_16 = arith.constant 0 : index
    %20 = vector.load %arg15[%c0_15, %c0_16] : memref<2x128xf32, #tpu.memory_space<vmem>>, vector<2x128xf32>
    tpu.vector_store %arg15[%c0_15, %c0_16], %19 {strides = array<i32>} : memref<2x128xf32, #tpu.memory_space<vmem>>, vector<2x128xf32>,
    %21 = vector.extract_strided_slice %19 {offsets = [0, 0], sizes = [2, 1], strides = [1, 1]} : vector<2x128xf32> to vector<2x1xf32>
    %22 = vector.extract_strided_slice %2 {offsets = [0, 0, 0], sizes = [2, 1, 32], strides = [1, 1, 1]} : vector<2x2x32xf32> to vector<2x1x32xf32>
    %23 = vector.shape_cast %22 : vector<2x1x32xf32> to vector<2x32xf32>
    %24 = vector.broadcast %21 : vector<2x1xf32> to vector<2x32xf32>
    %25 = arith.mulf %24, %23 : vector<2x32xf32>
    %26 = vector.extract_strided_slice %19 {offsets = [0, 1], sizes = [2, 1], strides = [1, 1]} : vector<2x128xf32> to vector<2x1xf32>
    %27 = vector.extract_strided_slice %2 {offsets = [0, 1, 0], sizes = [2, 1, 32], strides = [1, 1, 1]} : vector<2x2x32xf32> to vector<2x1x32xf32>
    %28 = vector.shape_cast %27 : vector<2x1x32xf32> to vector<2x32xf32>
    %29 = vector.broadcast %26 : vector<2x1xf32> to vector<2x32xf32>
    %30 = arith.mulf %29, %28 : vector<2x32xf32>
    %31 = arith.addf %25, %30 : vector<2x32xf32>
    %c0_17 = arith.constant 0 : index
    %c0_18 = arith.constant 0 : index
    %32 = vector.load %arg7[%c0_17, %c0_18] : memref<32x32xf32, #tpu.memory_space<vmem>>, vector<32x32xf32>
    %cst_19 = arith.constant dense<0.000000e+00> : vector<2x32xf32>
    %33 = tpu.matmul %0, %32, %cst_19 {dimension_numbers = #tpu.dot_dimension_numbers<[1], [0], [0], [1], [0, 0, 1, 1], [], []>} : vector<2x32xf32>, vector<32x32xf32>, vector<2x32xf32> -> vector<2x32xf32>
    %c0_20 = arith.constant 0 : index
    %c0_21 = arith.constant 0 : index
    %34 = vector.load %arg8[%c0_20, %c0_21] : memref<32x32xf32, #tpu.memory_space<vmem>>, vector<32x32xf32>
    %cst_22 = arith.constant dense<0.000000e+00> : vector<2x32xf32>
    %35 = tpu.matmul %31, %34, %cst_22 {dimension_numbers = #tpu.dot_dimension_numbers<[1], [0], [0], [1], [0, 0, 1, 1], [], []>} : vector<2x32xf32>, vector<32x32xf32>, vector<2x32xf32> -> vector<2x32xf32>
    %36 = arith.addf %33, %35 : vector<2x32xf32>
    %c0_23 = arith.constant 0 : index
    %c0_24 = arith.constant 0 : index
    %37 = vector.load %arg9[%c0_23, %c0_24] : memref<1x32xf32, #tpu.memory_space<vmem>>, vector<1x32xf32>
    %38 = vector.broadcast %37 : vector<1x32xf32> to vector<2x32xf32>
    %39 = arith.addf %36, %38 : vector<2x32xf32>
    %cst_25 = arith.constant 0.000000e+00 : f32
    %40 = vector.broadcast %cst_25 : f32 to vector<2x32xf32>
    %41 = arith.maximumf %39, %40 : vector<2x32xf32>
    %c0_26 = arith.constant 0 : index
    %c0_27 = arith.constant 0 : index
    %42 = vector.load %arg10[%c0_26, %c0_27] : memref<32x128xf32, #tpu.memory_space<vmem>>, vector<32x128xf32>
    %cst_28 = arith.constant dense<0.000000e+00> : vector<2x128xf32>
    %43 = tpu.matmul %41, %42, %cst_28 {dimension_numbers = #tpu.dot_dimension_numbers<[1], [0], [0], [1], [0, 0, 1, 1], [], []>} : vector<2x32xf32>, vector<32x128xf32>, vector<2x128xf32> -> vector<2x128xf32>
    %c0_29 = arith.constant 0 : index
    %c0_30 = arith.constant 0 : index
    %44 = vector.load %arg11[%c0_29, %c0_30] : memref<1x128xf32, #tpu.memory_space<vmem>>, vector<1x128xf32>
    %45 = vector.broadcast %44 : vector<1x128xf32> to vector<2x128xf32>
    %46 = arith.addf %43, %45 : vector<2x128xf32>
    %c0_31 = arith.constant 0 : index
    %c0_32 = arith.constant 0 : index
    %47 = vector.load %arg12[%c0_31, %c0_32] : memref<32x128xf32, #tpu.memory_space<vmem>>, vector<32x128xf32>
    %cst_33 = arith.constant dense<0.000000e+00> : vector<2x128xf32>
    %48 = tpu.matmul %1, %47, %cst_33 {dimension_numbers = #tpu.dot_dimension_numbers<[1], [0], [0], [1], [0, 0, 1, 1], [], []>} : vector<2x32xf32>, vector<32x128xf32>, vector<2x128xf32> -> vector<2x128xf32>
    %c0_34 = arith.constant 0 : index
    %c0_35 = arith.constant 0 : index
    %49 = vector.load %arg13[%c0_34, %c0_35] : memref<1x128xf32, #tpu.memory_space<vmem>>, vector<1x128xf32>
    %50 = vector.broadcast %49 : vector<1x128xf32> to vector<2x128xf32>
    %51 = arith.addf %48, %50 : vector<2x128xf32>
    %52 = vector.extract_strided_slice %46 {offsets = [0, 0], sizes = [2, 32], strides = [1, 1]} : vector<2x128xf32> to vector<2x32xf32>
    %53 = vector.extract_strided_slice %51 {offsets = [0, 0], sizes = [2, 32], strides = [1, 1]} : vector<2x128xf32> to vector<2x32xf32>
    %54 = arith.addf %52, %53 : vector<2x32xf32>
    %55 = arith.negf %54 : vector<2x32xf32>
    %56 = math.exp %55 : vector<2x32xf32>
    %cst_36 = arith.constant 1.000000e+00 : f32
    %57 = vector.broadcast %cst_36 : f32 to vector<2x32xf32>
    %58 = arith.addf %57, %56 : vector<2x32xf32>
    %59 = arith.divf %57, %58 : vector<2x32xf32>
    %60 = vector.extract_strided_slice %46 {offsets = [0, 32], sizes = [2, 32], strides = [1, 1]} : vector<2x128xf32> to vector<2x32xf32>
    %61 = vector.extract_strided_slice %51 {offsets = [0, 32], sizes = [2, 32], strides = [1, 1]} : vector<2x128xf32> to vector<2x32xf32>
    %62 = arith.addf %60, %61 : vector<2x32xf32>
    %63 = arith.negf %62 : vector<2x32xf32>
    %64 = math.exp %63 : vector<2x32xf32>
    %cst_37 = arith.constant 1.000000e+00 : f32
    %65 = vector.broadcast %cst_37 : f32 to vector<2x32xf32>
    %66 = arith.addf %65, %64 : vector<2x32xf32>
    %67 = arith.divf %65, %66 : vector<2x32xf32>
    %68 = vector.extract_strided_slice %46 {offsets = [0, 64], sizes = [2, 32], strides = [1, 1]} : vector<2x128xf32> to vector<2x32xf32>
    %69 = vector.extract_strided_slice %51 {offsets = [0, 64], sizes = [2, 32], strides = [1, 1]} : vector<2x128xf32> to vector<2x32xf32>
    %70 = arith.mulf %59, %69 : vector<2x32xf32>
    %71 = arith.addf %68, %70 : vector<2x32xf32>
    %72 = math.tanh %71 : vector<2x32xf32>
    %cst_38 = arith.constant 1.000000e+00 : f32
    %73 = vector.broadcast %cst_38 : f32 to vector<2x32xf32>
    %74 = arith.subf %73, %67 : vector<2x32xf32>
    %75 = arith.mulf %74, %72 : vector<2x32xf32>
    %76 = arith.mulf %67, %1 : vector<2x32xf32>
    %77 = arith.addf %75, %76 : vector<2x32xf32>
    %c0_39 = arith.constant 0 : index
    %c0_40 = arith.constant 0 : index
    %78 = vector.load %arg14[%c0_39, %c0_40] : memref<2x32xf32, #tpu.memory_space<vmem>>, vector<2x32xf32>
    tpu.vector_store %arg14[%c0_39, %c0_40], %77 {strides = array<i32>} : memref<2x32xf32, #tpu.memory_space<vmem>>, vector<2x32xf32>,
    return
  }
  func.func @transform_0(%arg0: i32) -> (i32, i32) {
    %c0_i32 = arith.constant 0 : i32
    %c0_i32_0 = arith.constant 0 : i32
    %c0_i32_1 = arith.constant 0 : i32
    return %c0_i32, %c0_i32_0 : i32, i32
  }
  func.func @transform_1(%arg0: i32) -> (i32, i32) {
    %c0_i32 = arith.constant 0 : i32
    %c0_i32_0 = arith.constant 0 : i32
    %c0_i32_1 = arith.constant 0 : i32
    return %c0_i32, %c0_i32_0 : i32, i32
  }
  func.func @transform_2(%arg0: i32) -> (i32, i32, i32) {
    %c0_i32 = arith.constant 0 : i32
    %c0_i32_0 = arith.constant 0 : i32
    %c0_i32_1 = arith.constant 0 : i32
    %c0_i32_2 = arith.constant 0 : i32
    return %c0_i32, %c0_i32_0, %c0_i32_1 : i32, i32, i32
  }
  func.func @transform_3(%arg0: i32) -> (i32, i32) {
    %c0_i32 = arith.constant 0 : i32
    %c0_i32_0 = arith.constant 0 : i32
    %c0_i32_1 = arith.constant 0 : i32
    return %c0_i32, %c0_i32_0 : i32, i32
  }
  func.func @transform_4(%arg0: i32) -> (i32, i32) {
    %c0_i32 = arith.constant 0 : i32
    %c0_i32_0 = arith.constant 0 : i32
    %c0_i32_1 = arith.constant 0 : i32
    return %c0_i32, %c0_i32_0 : i32, i32
  }
  func.func @transform_5(%arg0: i32) -> (i32, i32) {
    %c0_i32 = arith.constant 0 : i32
    %c0_i32_0 = arith.constant 0 : i32
    %c0_i32_1 = arith.constant 0 : i32
    return %c0_i32, %c0_i32_0 : i32, i32
  }
  func.func @transform_6(%arg0: i32) -> (i32, i32) {
    %c0_i32 = arith.constant 0 : i32
    %c0_i32_0 = arith.constant 0 : i32
    %c0_i32_1 = arith.constant 0 : i32
    return %c0_i32, %c0_i32_0 : i32, i32
  }
  func.func @transform_7(%arg0: i32) -> (i32, i32) {
    %c0_i32 = arith.constant 0 : i32
    %c0_i32_0 = arith.constant 0 : i32
    %c0_i32_1 = arith.constant 0 : i32
    return %c0_i32, %c0_i32_0 : i32, i32
  }
  func.func @transform_8(%arg0: i32) -> (i32, i32) {
    %c0_i32 = arith.constant 0 : i32
    %c0_i32_0 = arith.constant 0 : i32
    %c0_i32_1 = arith.constant 0 : i32
    return %c0_i32, %c0_i32_0 : i32, i32
  }
  func.func @transform_9(%arg0: i32) -> (i32, i32) {
    %c0_i32 = arith.constant 0 : i32
    %c0_i32_0 = arith.constant 0 : i32
    %c0_i32_1 = arith.constant 0 : i32
    return %c0_i32, %c0_i32_0 : i32, i32
  }
  func.func @transform_10(%arg0: i32) -> (i32, i32) {
    %c0_i32 = arith.constant 0 : i32
    %c0_i32_0 = arith.constant 0 : i32
    %c0_i32_1 = arith.constant 0 : i32
    return %c0_i32, %c0_i32_0 : i32, i32
  }
  func.func @transform_11(%arg0: i32) -> (i32, i32) {
    %c0_i32 = arith.constant 0 : i32
    %c0_i32_0 = arith.constant 0 : i32
    %c0_i32_1 = arith.constant 0 : i32
    return %c0_i32, %c0_i32_0 : i32, i32
  }
  func.func @transform_12(%arg0: i32) -> (i32, i32) {
    %c0_i32 = arith.constant 0 : i32
    %c0_i32_0 = arith.constant 0 : i32
    %c0_i32_1 = arith.constant 0 : i32
    return %c0_i32, %c0_i32_0 : i32, i32
  }
  func.func @transform_13(%arg0: i32) -> (i32, i32) {
    %c0_i32 = arith.constant 0 : i32
    %c0_i32_0 = arith.constant 0 : i32
    %c0_i32_1 = arith.constant 0 : i32
    return %c0_i32, %c0_i32_0 : i32, i32
  }
  func.func @transform_14(%arg0: i32) -> (i32, i32) {
    %c0_i32 = arith.constant 0 : i32
    %c0_i32_0 = arith.constant 0 : i32
    %c0_i32_1 = arith.constant 0 : i32
    return %c0_i32, %c0_i32_0 : i32, i32
  }
}

module attributes {stable_mosaic.version = 11 : i64} {
  func.func @vocab_logsoftmax_kernel(%arg0: i32, %arg1: memref<2x32xf32, #tpu.memory_space<vmem>>, %arg2: memref<32x1024xbf16, #tpu.memory_space<vmem>>, %arg3: memref<1x1024xf32, #tpu.memory_space<vmem>>, %arg4: memref<2x1024xf32, #tpu.memory_space<vmem>>, %arg5: memref<1x2x1xf32, #tpu.memory_space<vmem>>, %arg6: memref<1x2x1xf32, #tpu.memory_space<vmem>>) attributes {dimension_semantics = [#tpu.dimension_semantics<parallel>], iteration_bounds = array<i64: 4>, scalar_prefetch = 0 : i64, scratch_operands = 0 : i64, tpu.core_type = #tpu.core_type<tc>, window_params = [{pipeline_mode = #tpu.pipeline_mode<synchronous>, transform_indices = @transform_0, window_bounds = array<i64: 2, 32>}, {transform_indices = @transform_1, window_bounds = array<i64: 32, 1024>}, {transform_indices = @transform_2, window_bounds = array<i64: 1, 1024>}, {transform_indices = @transform_3, window_bounds = array<i64: 2, 1024>}, {transform_indices = @transform_4, window_bounds = array<i64: 1, 2, 1>}, {transform_indices = @transform_5, window_bounds = array<i64: 1, 2, 1>}]} {
    %c0 = arith.constant 0 : index
    %c0_0 = arith.constant 0 : index
    %0 = vector.load %arg1[%c0, %c0_0] : memref<2x32xf32, #tpu.memory_space<vmem>>, vector<2x32xf32>
    %c0_1 = arith.constant 0 : index
    %c0_2 = arith.constant 0 : index
    %1 = vector.load %arg2[%c0_1, %c0_2] : memref<32x1024xbf16, #tpu.memory_space<vmem>>, vector<32x1024xbf16>
    %2 = arith.extf %1 : vector<32x1024xbf16> to vector<32x1024xf32>
    %cst = arith.constant dense<0.000000e+00> : vector<2x1024xf32>
    %3 = tpu.matmul %0, %2, %cst {dimension_numbers = #tpu.dot_dimension_numbers<[1], [0], [0], [1], [0, 0, 1, 1], [], []>} : vector<2x32xf32>, vector<32x1024xf32>, vector<2x1024xf32> -> vector<2x1024xf32>
    %c0_3 = arith.constant 0 : index
    %c0_4 = arith.constant 0 : index
    %4 = vector.load %arg3[%c0_3, %c0_4] : memref<1x1024xf32, #tpu.memory_space<vmem>>, vector<1x1024xf32>
    %5 = vector.broadcast %4 : vector<1x1024xf32> to vector<2x1024xf32>
    %6 = arith.addf %3, %5 : vector<2x1024xf32>
    %c0_5 = arith.constant 0 : index
    %c0_6 = arith.constant 0 : index
    %7 = vector.load %arg4[%c0_5, %c0_6] : memref<2x1024xf32, #tpu.memory_space<vmem>>, vector<2x1024xf32>
    tpu.vector_store %arg4[%c0_5, %c0_6], %6 {strides = array<i32>} : memref<2x1024xf32, #tpu.memory_space<vmem>>, vector<2x1024xf32>,
    %cst_7 = arith.constant dense<0xFF800000> : vector<2xf32>
    %8 = vector.multi_reduction <maximumf>, %6, %cst_7 [1] : vector<2x1024xf32> to vector<2xf32>
    %9 = vector.shape_cast %8 : vector<2xf32> to vector<2x1xf32>
    %c0_8 = arith.constant 0 : index
    %c0_9 = arith.constant 0 : index
    %c0_10 = arith.constant 0 : index
    %10 = vector.load %arg5[%c0_8, %c0_9, %c0_10] : memref<1x2x1xf32, #tpu.memory_space<vmem>>, vector<1x2x1xf32>
    %11 = vector.shape_cast %10 : vector<1x2x1xf32> to vector<2x1xf32>
    %12 = vector.shape_cast %9 : vector<2x1xf32> to vector<1x2x1xf32>
    tpu.vector_store %arg5[%c0_8, %c0_9, %c0_10], %12 {strides = array<i32>} : memref<1x2x1xf32, #tpu.memory_space<vmem>>, vector<1x2x1xf32>,
    %13 = vector.broadcast %9 : vector<2x1xf32> to vector<2x1024xf32>
    %14 = arith.subf %6, %13 : vector<2x1024xf32>
    %15 = math.exp %14 : vector<2x1024xf32>
    %cst_11 = arith.constant dense<0.000000e+00> : vector<2xf32>
    %16 = vector.multi_reduction <add>, %15, %cst_11 [1] : vector<2x1024xf32> to vector<2xf32>
    %17 = vector.shape_cast %16 : vector<2xf32> to vector<2x1xf32>
    %c0_12 = arith.constant 0 : index
    %c0_13 = arith.constant 0 : index
    %c0_14 = arith.constant 0 : index
    %18 = vector.load %arg6[%c0_12, %c0_13, %c0_14] : memref<1x2x1xf32, #tpu.memory_space<vmem>>, vector<1x2x1xf32>
    %19 = vector.shape_cast %18 : vector<1x2x1xf32> to vector<2x1xf32>
    %20 = vector.shape_cast %17 : vector<2x1xf32> to vector<1x2x1xf32>
    tpu.vector_store %arg6[%c0_12, %c0_13, %c0_14], %20 {strides = array<i32>} : memref<1x2x1xf32, #tpu.memory_space<vmem>>, vector<1x2x1xf32>,
    return
  }
  func.func @transform_0(%arg0: i32) -> (i32, i32) {
    %c0_i32 = arith.constant 0 : i32
    %c0_i32_0 = arith.constant 0 : i32
    %c0_i32_1 = arith.constant 0 : i32
    return %c0_i32, %c0_i32_0 : i32, i32
  }
  func.func @transform_1(%arg0: i32) -> (i32, i32) {
    %c0_i32 = arith.constant 0 : i32
    %c0_i32_0 = arith.constant 0 : i32
    return %c0_i32, %arg0 : i32, i32
  }
  func.func @transform_2(%arg0: i32) -> (i32, i32) {
    %c0_i32 = arith.constant 0 : i32
    %c0_i32_0 = arith.constant 0 : i32
    return %c0_i32, %arg0 : i32, i32
  }
  func.func @transform_3(%arg0: i32) -> (i32, i32) {
    %c0_i32 = arith.constant 0 : i32
    %c0_i32_0 = arith.constant 0 : i32
    return %c0_i32, %arg0 : i32, i32
  }
  func.func @transform_4(%arg0: i32) -> (i32, i32, i32) {
    %c0_i32 = arith.constant 0 : i32
    %c0_i32_0 = arith.constant 0 : i32
    %c0_i32_1 = arith.constant 0 : i32
    return %arg0, %c0_i32, %c0_i32_0 : i32, i32, i32
  }
  func.func @transform_5(%arg0: i32) -> (i32, i32, i32) {
    %c0_i32 = arith.constant 0 : i32
    %c0_i32_0 = arith.constant 0 : i32
    %c0_i32_1 = arith.constant 0 : i32
    return %arg0, %c0_i32, %c0_i32_0 : i32, i32, i32
  }
}

</mosaic_0001>

<llo_original>
// kernel: _decoder_rnn_forward_impl.2
$region0: #{_decoder_rnn_forward_impl.2}
  #allocation0 [shape = 'u32[]', space=smem, size = 0x4, offset = 0x4, fixed_abs, tag = 'smem constant byte address 0x4 - core index']
  #allocation1 [shape = 'u32[144,128]{1,0:T(1,128)}', space=vmem, size = 0x12000, scoped, tag = 'internal scratch']
  %s0 = inlined_call_operand.vmem [shape: f32[2,32], index: 0, kind: input, shape index: {}]
  %s1 = inlined_call_operand.vmem [shape: f32[2,32], index: 1, kind: input, shape index: {}]
  %s2 = inlined_call_operand.vmem [shape: f32[2,2,32], index: 2, kind: input, shape index: {}]
  %s3 = inlined_call_operand.vmem [shape: f32[32,128], index: 3, kind: input, shape index: {}]
  %s4 = inlined_call_operand.vmem [shape: f32[32,128], index: 4, kind: input, shape index: {}]
  %s5 = inlined_call_operand.vmem [shape: f32[1,128], index: 5, kind: input, shape index: {}]
  %s6 = inlined_call_operand.vmem [shape: f32[32,32], index: 6, kind: input, shape index: {}]
  %s7 = inlined_call_operand.vmem [shape: f32[32,32], index: 7, kind: input, shape index: {}]
  %s8 = inlined_call_operand.vmem [shape: f32[1,32], index: 8, kind: input, shape index: {}]
  %s9 = inlined_call_operand.vmem [shape: f32[32,128], index: 9, kind: input, shape index: {}]
  %s10 = inlined_call_operand.vmem [shape: f32[1,128], index: 10, kind: input, shape index: {}]
  %s11 = inlined_call_operand.vmem [shape: f32[32,128], index: 11, kind: input, shape index: {}]
  %s12 = inlined_call_operand.vmem [shape: f32[1,128], index: 12, kind: input, shape index: {}]
  %s13 = inlined_call_operand.vmem [shape: f32[2,32], index: 13, kind: output, shape index: {0}]
  %s14 = inlined_call_operand.hbm [shape: f32[2,128], index: 14, kind: output, shape index: {1}]
  %15 = xla_tuple %s13, %s14
  %s16 = sld [smem:[#allocation0]]
  $region70: #{_decoder_rnn_forward_impl.2} parent=0
    _
  %s18 = ssub.s32 1, %s16
  %s19 = scalar_select 0, %s18, %s16
  $region1: #{_decoder_rnn_forward_impl.2} parent=0
    #allocation2 [shape = 'u8[1024]{0}', space=vmem, size = 0x400, scoped, tag = 'output window, operand 1, single buffered']
    #allocation3 [shape = 's32[1]{0}', space=sflag, size = 0x4, scoped, tag = 'scoped memory for _decoder_rnn_forward_impl.2']
    %20 = vsyncpa [#allocation3], 0
    // Predicated region
    $region2: #{_decoder_rnn_forward_impl.2} parent=1 // pred_check
      _
    $region3: #{_decoder_rnn_forward_impl.2} parent=1 // pred_check_branch
      %22 = sbr.rel (0) target = $region5
    $region4: #{_decoder_rnn_forward_impl.2} parent=1 // pred_region
      _
    $region5: #{_decoder_rnn_forward_impl.2} parent=1 // pred_fallthru
      _
    // Predicated region
    $region6: #{_decoder_rnn_forward_impl.2} parent=1 // pred_check
      _
    $region7: #{_decoder_rnn_forward_impl.2} parent=1 // pred_check_branch
      %24 = sbr.rel (0) target = $region9
    $region8: #{_decoder_rnn_forward_impl.2} parent=1 // pred_region
      _
    $region9: #{_decoder_rnn_forward_impl.2} parent=1 // pred_fallthru
      _
    // Predicated region
    $region10: #{_decoder_rnn_forward_impl.2} parent=1 // pred_check
      _
    $region11: #{_decoder_rnn_forward_impl.2} parent=1 // pred_check_branch
      %26 = sbr.rel (0) target = $region13
    $region12: #{_decoder_rnn_forward_impl.2} parent=1 // pred_region
      _
    $region13: #{_decoder_rnn_forward_impl.2} parent=1 // pred_fallthru
      _
    // Predicated region
    $region14: #{_decoder_rnn_forward_impl.2} parent=1 // pred_check
      _
    $region15: #{_decoder_rnn_forward_impl.2} parent=1 // pred_check_branch
      %28 = sbr.rel (0) target = $region17
    $region16: #{_decoder_rnn_forward_impl.2} parent=1 // pred_region
      _
    $region17: #{_decoder_rnn_forward_impl.2} parent=1 // pred_fallthru
      _
    // Predicated region
    $region18: #{_decoder_rnn_forward_impl.2} parent=1 // pred_check
      _
    $region19: #{_decoder_rnn_forward_impl.2} parent=1 // pred_check_branch
      %30 = sbr.rel (0) target = $region21
    $region20: #{_decoder_rnn_forward_impl.2} parent=1 // pred_region
      _
    $region21: #{_decoder_rnn_forward_impl.2} parent=1 // pred_fallthru
      _
    // Predicated region
    $region22: #{_decoder_rnn_forward_impl.2} parent=1 // pred_check
      _
    $region23: #{_decoder_rnn_forward_impl.2} parent=1 // pred_check_branch
      %32 = sbr.rel (0) target = $region25
    $region24: #{_decoder_rnn_forward_impl.2} parent=1 // pred_region
      _
    $region25: #{_decoder_rnn_forward_impl.2} parent=1 // pred_fallthru
      _
    // Predicated region
    $region26: #{_decoder_rnn_forward_impl.2} parent=1 // pred_check
      _
    $region27: #{_decoder_rnn_forward_impl.2} parent=1 // pred_check_branch
      %34 = sbr.rel (0) target = $region29
    $region28: #{_decoder_rnn_forward_impl.2} parent=1 // pred_region
      _
    $region29: #{_decoder_rnn_forward_impl.2} parent=1 // pred_fallthru
      _
    // Predicated region
    $region30: #{_decoder_rnn_forward_impl.2} parent=1 // pred_check
      _
    $region31: #{_decoder_rnn_forward_impl.2} parent=1 // pred_check_branch
      %36 = sbr.rel (0) target = $region33
    $region32: #{_decoder_rnn_forward_impl.2} parent=1 // pred_region
      _
    $region33: #{_decoder_rnn_forward_impl.2} parent=1 // pred_fallthru
      _
    // Predicated region
    $region34: #{_decoder_rnn_forward_impl.2} parent=1 // pred_check
      _
    $region35: #{_decoder_rnn_forward_impl.2} parent=1 // pred_check_branch
      %38 = sbr.rel (0) target = $region37
    $region36: #{_decoder_rnn_forward_impl.2} parent=1 // pred_region
      _
    $region37: #{_decoder_rnn_forward_impl.2} parent=1 // pred_fallthru
      _
    // Predicated region
    $region38: #{_decoder_rnn_forward_impl.2} parent=1 // pred_check
      _
    $region39: #{_decoder_rnn_forward_impl.2} parent=1 // pred_check_branch
      %40 = sbr.rel (0) target = $region41
    $region40: #{_decoder_rnn_forward_impl.2} parent=1 // pred_region
      _
    $region41: #{_decoder_rnn_forward_impl.2} parent=1 // pred_fallthru
      _
    // Predicated region
    $region42: #{_decoder_rnn_forward_impl.2} parent=1 // pred_check
      _
    $region43: #{_decoder_rnn_forward_impl.2} parent=1 // pred_check_branch
      %42 = sbr.rel (0) target = $region45
    $region44: #{_decoder_rnn_forward_impl.2} parent=1 // pred_region
      _
    $region45: #{_decoder_rnn_forward_impl.2} parent=1 // pred_fallthru
      _
    // Predicated region
    $region46: #{_decoder_rnn_forward_impl.2} parent=1 // pred_check
      _
    $region47: #{_decoder_rnn_forward_impl.2} parent=1 // pred_check_branch
      %44 = sbr.rel (0) target = $region49
    $region48: #{_decoder_rnn_forward_impl.2} parent=1 // pred_region
      _
    $region49: #{_decoder_rnn_forward_impl.2} parent=1 // pred_fallthru
      _
    // Predicated region
    $region50: #{_decoder_rnn_forward_impl.2} parent=1 // pred_check
      _
    $region51: #{_decoder_rnn_forward_impl.2} parent=1 // pred_check_branch
      %46 = sbr.rel (0) target = $region53
    $region52: #{_decoder_rnn_forward_impl.2} parent=1 // pred_region
      _
    $region53: #{_decoder_rnn_forward_impl.2} parent=1 // pred_fallthru
      _
    %v47 = vld [vmem:[%s0] sm:$0x3]
    %v48 = vld [vmem:[%s1] sm:$0x3]
    %v49 = vld [vmem:[%s2] sm:$0x3]
    %v50 = vld [vmem:[%s2 + $0x2] sm:$0x3]
    %v51 = vld [vmem:[%s3] sm:$0xff]
    %v52 = vld [vmem:[%s3 + $0x8] sm:$0xff]
    %v53 = vld [vmem:[%s3 + $0x10] sm:$0xff]
    %v54 = vld [vmem:[%s3 + $0x18] sm:$0xff]
    %v55 = vld [vmem:[%s4] sm:$0xff]
    %v56 = vld [vmem:[%s4 + $0x8] sm:$0xff]
    %v57 = vld [vmem:[%s4 + $0x10] sm:$0xff]
    %v58 = vld [vmem:[%s4 + $0x18] sm:$0xff]
    %vm59 = vcmask 261120
    %v61 = vsel %vm59, %v48, 0
    %63 = vmatprep.subr.mxu0 0.0
    %64 = vmatpush1.msra.mxu0 %v55
    %65 = vmatprep.subr.mxu0 0.0
    %66 = vmatpush1.msra.mxu0 %v56
    %67 = vmatprep.subr.mxu0 0.0
    %68 = vmatpush1.msra.mxu0 %v57
    %69 = vmatprep.subr.mxu0 0.0
    %70 = vmatpush1.msra.mxu0 %v58
    %71 = vmatprep.subr.mxu0 0.0
    %72 = vmatpush1.msra.mxu0 0.0
    %73 = vmatprep.subr.mxu0 0.0
    %74 = vmatpush1.msra.mxu0 0.0
    %75 = vmatprep.subr.mxu0 0.0
    %76 = vmatpush1.msra.mxu0 0.0
    %77 = vmatprep.subr.mxu0 0.0
    %78 = vmatpush1.msra.mxu0 0.0
    %79 = vmatprep.subr.mxu0 0.0
    %80 = vmatpush1.msra.mxu0 0.0
    %81 = vmatprep.subr.mxu0 0.0
    %82 = vmatpush1.msra.mxu0 0.0
    %83 = vmatprep.subr.mxu0 0.0
    %84 = vmatpush1.msra.mxu0 0.0
    %85 = vmatprep.subr.mxu0 0.0
    %86 = vmatpush1.msra.mxu0 0.0
    %87 = vmatprep.subr.mxu0 0.0
    %88 = vmatpush1.msra.mxu0 0.0
    %89 = vmatprep.subr.mxu0 0.0
    %90 = vmatpush1.msra.mxu0 0.0
    %91 = vmatprep.subr.mxu0 0.0
    %92 = vmatpush1.msra.mxu0 0.0
    %93 = vmatprep.subr.mxu0 0.0
    %94 = vmatpush1.msra.mxu0 0.0
    %95 = vmatprep.subr.mxu0 0.0
    %96 = vmatpush1.msra.mxu0 0.0
    %97 = vmatprep.subr.mxu0 0.0
    %98 = vmatpush1.msra.mxu0 0.0
    %99 = vmatprep.subr.mxu0 0.0
    %100 = vmatpush1.msra.mxu0 0.0
    %101 = vmatprep.subr.mxu0 0.0
    %102 = vmatpush1.msra.mxu0 0.0
    %103 = vmatprep.subr.mxu0 0.0
    %104 = vmatpush1.msra.mxu0 0.0
    %105 = vmatprep.subr.mxu0 0.0
    %106 = vmatpush1.msra.mxu0 0.0
    %107 = vmatprep.subr.mxu0 0.0
    %108 = vmatpush1.msra.mxu0 0.0
    %109 = vmatprep.subr.mxu0 0.0
    %110 = vmatpush1.msra.mxu0 0.0
    %111 = vmatprep.subr.mxu0 0.0
    %112 = vmatpush1.msra.mxu0 0.0
    %113 = vmatprep.subr.mxu0 0.0
    %114 = vmatpush1.msra.mxu0 0.0
    %115 = vmatprep.subr.mxu0 0.0
    %116 = vmatpush1.msra.mxu0 0.0
    %117 = vmatprep.subr.mxu0 0.0
    %118 = vmatpush1.msra.mxu0 0.0
    %119 = vmatprep.subr.mxu0 0.0
    %120 = vmatpush1.msra.mxu0 0.0
    %121 = vmatprep.subr.mxu0 0.0
    %122 = vmatpush1.msra.mxu0 0.0
    %123 = vmatprep.subr.mxu0 0.0
    %124 = vmatpush1.msra.mxu0 0.0
    %125 = vmatprep.subr.mxu0 0.0
    %126 = vmatpush1.msra.mxu0 0.0
    %127 = vmatprep.mubr.f32.mxu0 0.0
    %128 = vmatmul.mubr.f32.gmra.mrb[0].mxu0 %v61
    %v129 = vpop.f32.mrb[0].mxu0
    %v130 = vadd.f32 0.0, %v129
    %v131 = vpop.f32.mrb[0].mxu0
    %132 = vdwg.mxu0
    %v134 = vsel %vm59, %v47, 0
    %136 = vmatprep.subr.mxu0 0.0
    %137 = vmatpush1.msra.mxu0 %v51
    %138 = vmatprep.subr.mxu0 0.0
    %139 = vmatpush1.msra.mxu0 %v52
    %140 = vmatprep.subr.mxu0 0.0
    %141 = vmatpush1.msra.mxu0 %v53
    %142 = vmatprep.subr.mxu0 0.0
    %143 = vmatpush1.msra.mxu0 %v54
    %144 = vmatprep.subr.mxu0 0.0
    %145 = vmatpush1.msra.mxu0 0.0
    %146 = vmatprep.subr.mxu0 0.0
    %147 = vmatpush1.msra.mxu0 0.0
    %148 = vmatprep.subr.mxu0 0.0
    %149 = vmatpush1.msra.mxu0 0.0
    %150 = vmatprep.subr.mxu0 0.0
    %151 = vmatpush1.msra.mxu0 0.0
    %152 = vmatprep.subr.mxu0 0.0
    %153 = vmatpush1.msra.mxu0 0.0
    %154 = vmatprep.subr.mxu0 0.0
    %155 = vmatpush1.msra.mxu0 0.0
    %156 = vmatprep.subr.mxu0 0.0
    %157 = vmatpush1.msra.mxu0 0.0
    %158 = vmatprep.subr.mxu0 0.0
    %159 = vmatpush1.msra.mxu0 0.0
    %160 = vmatprep.subr.mxu0 0.0
    %161 = vmatpush1.msra.mxu0 0.0
    %162 = vmatprep.subr.mxu0 0.0
    %163 = vmatpush1.msra.mxu0 0.0
    %164 = vmatprep.subr.mxu0 0.0
    %165 = vmatpush1.msra.mxu0 0.0
    %166 = vmatprep.subr.mxu0 0.0
    %167 = vmatpush1.msra.mxu0 0.0
    %168 = vmatprep.subr.mxu0 0.0
    %169 = vmatpush1.msra.mxu0 0.0
    %170 = vmatprep.subr.mxu0 0.0
    %171 = vmatpush1.msra.mxu0 0.0
    %172 = vmatprep.subr.mxu0 0.0
    %173 = vmatpush1.msra.mxu0 0.0
    %174 = vmatprep.subr.mxu0 0.0
    %175 = vmatpush1.msra.mxu0 0.0
    %176 = vmatprep.subr.mxu0 0.0
    %177 = vmatpush1.msra.mxu0 0.0
    %178 = vmatprep.subr.mxu0 0.0
    %179 = vmatpush1.msra.mxu0 0.0
    %180 = vmatprep.subr.mxu0 0.0
    %181 = vmatpush1.msra.mxu0 0.0
    %182 = vmatprep.subr.mxu0 0.0
    %183 = vmatpush1.msra.mxu0 0.0
    %184 = vmatprep.subr.mxu0 0.0
    %185 = vmatpush1.msra.mxu0 0.0
    %186 = vmatprep.subr.mxu0 0.0
    %187 = vmatpush1.msra.mxu0 0.0
    %188 = vmatprep.subr.mxu0 0.0
    %189 = vmatpush1.msra.mxu0 0.0
    %190 = vmatprep.subr.mxu0 0.0
    %191 = vmatpush1.msra.mxu0 0.0
    %192 = vmatprep.subr.mxu0 0.0
    %193 = vmatpush1.msra.mxu0 0.0
    %194 = vmatprep.subr.mxu0 0.0
    %195 = vmatpush1.msra.mxu0 0.0
    %196 = vmatprep.subr.mxu0 0.0
    %197 = vmatpush1.msra.mxu0 0.0
    %198 = vmatprep.subr.mxu0 0.0
    %199 = vmatpush1.msra.mxu0 0.0
    %200 = vmatprep.mubr.f32.mxu0 0.0
    %201 = vmatmul.mubr.f32.gmra.mrb[0].mxu0 %v134
    %v202 = vpop.f32.mrb[0].mxu0
    %v203 = vadd.f32 %v130, %v202
    %v204 = vpop.f32.mrb[0].mxu0
    %205 = vdwg.mxu0
    %v206 = vld [vmem:[%s5] sm:$0x1]
    %v208 = vlaneseq
    %v209 = vshrl.u32 %v208, 7
    %v210 = vsub.s32 0, %v209
    %v211 = vrot.slane %v206, %v210
    %v213 = vadd.f32 %v203, %v211
    %vm214 = vcmask 1041408
    %v215 = vsel %vm214, %v213, -inf
    %216 = vmax.xlane.f32.xlu0 %v215
    %v217 = vpop.xlane.xlu0 %216
    %v218 = vsub.f32 %v213, %v217
    %v219 = vmul.f32 %v218, 1.442695
    %v220 = vpow.pop %v219
    %v221 = vsel %vm214, %v220, 0.0
    %222 = vadd.xlane.f32.xlu0 %v221
    %v223 = vpop.xlane.xlu0 %222
    %v224 = vrcp.pop %v223
    %v225 = vmul.f32 %v220, %v224
    %226 = vst [vmem:[#allocation2] sm:$0x3] %v225
    %228 = vset.pattern.permute.xlu0 0
    %229 = vperm.xlu0 %228, %v225
    %v230 = vpop.permute.xlu0 %229
    %v234 = vrot.slane %v50, 7
    %vm235 = vcmask 1041409
    %v236 = vsel %vm235, %v234, %v49
    %v238 = vmul.f32 %v230, %v236
    %239 = vset.pattern.permute.xlu0 1
    %240 = vperm.xlu0 %239, %v225
    %v241 = vpop.permute.xlu0 %240
    %v243 = vrot.slane %v49, 1
    %v244 = vsel %vm235, %v50, %v243
    %v246 = vmul.f32 %v241, %v244
    %v247 = vadd.f32 %v238, %v246
    %v248 = vld [vmem:[%s6] sm:$0xff]
    %v249 = vld [vmem:[%s6 + $0x8] sm:$0xff]
    %v250 = vld [vmem:[%s6 + $0x10] sm:$0xff]
    %v251 = vld [vmem:[%s6 + $0x18] sm:$0xff]
    %v252 = vld [vmem:[%s7] sm:$0xff]
    %v253 = vld [vmem:[%s7 + $0x8] sm:$0xff]
    %v254 = vld [vmem:[%s7 + $0x10] sm:$0xff]
    %v255 = vld [vmem:[%s7 + $0x18] sm:$0xff]
    %v257 = vsel %vm59, %v247, 0
    %259 = vmatprep.subr.mxu0 0.0
    %260 = vmatpush1.msra.mxu0 %v252
    %261 = vmatprep.subr.mxu0 0.0
    %262 = vmatpush1.msra.mxu0 %v253
    %263 = vmatprep.subr.mxu0 0.0
    %264 = vmatpush1.msra.mxu0 %v254
    %265 = vmatprep.subr.mxu0 0.0
    %266 = vmatpush1.msra.mxu0 %v255
    %267 = vmatprep.subr.mxu0 0.0
    %268 = vmatpush1.msra.mxu0 0.0
    %269 = vmatprep.subr.mxu0 0.0
    %270 = vmatpush1.msra.mxu0 0.0
    %271 = vmatprep.subr.mxu0 0.0
    %272 = vmatpush1.msra.mxu0 0.0
    %273 = vmatprep.subr.mxu0 0.0
    %274 = vmatpush1.msra.mxu0 0.0
    %275 = vmatprep.subr.mxu0 0.0
    %276 = vmatpush1.msra.mxu0 0.0
    %277 = vmatprep.subr.mxu0 0.0
    %278 = vmatpush1.msra.mxu0 0.0
    %279 = vmatprep.subr.mxu0 0.0
    %280 = vmatpush1.msra.mxu0 0.0
    %281 = vmatprep.subr.mxu0 0.0
    %282 = vmatpush1.msra.mxu0 0.0
    %283 = vmatprep.subr.mxu0 0.0
    %284 = vmatpush1.msra.mxu0 0.0
    %285 = vmatprep.subr.mxu0 0.0
    %286 = vmatpush1.msra.mxu0 0.0
    %287 = vmatprep.subr.mxu0 0.0
    %288 = vmatpush1.msra.mxu0 0.0
    %289 = vmatprep.subr.mxu0 0.0
    %290 = vmatpush1.msra.mxu0 0.0
    %291 = vmatprep.subr.mxu0 0.0
    %292 = vmatpush1.msra.mxu0 0.0
    %293 = vmatprep.subr.mxu0 0.0
    %294 = vmatpush1.msra.mxu0 0.0
    %295 = vmatprep.subr.mxu0 0.0
    %296 = vmatpush1.msra.mxu0 0.0
    %297 = vmatprep.subr.mxu0 0.0
    %298 = vmatpush1.msra.mxu0 0.0
    %299 = vmatprep.subr.mxu0 0.0
    %300 = vmatpush1.msra.mxu0 0.0
    %301 = vmatprep.subr.mxu0 0.0
    %302 = vmatpush1.msra.mxu0 0.0
    %303 = vmatprep.subr.mxu0 0.0
    %304 = vmatpush1.msra.mxu0 0.0
    %305 = vmatprep.subr.mxu0 0.0
    %306 = vmatpush1.msra.mxu0 0.0
    %307 = vmatprep.subr.mxu0 0.0
    %308 = vmatpush1.msra.mxu0 0.0
    %309 = vmatprep.subr.mxu0 0.0
    %310 = vmatpush1.msra.mxu0 0.0
    %311 = vmatprep.subr.mxu0 0.0
    %312 = vmatpush1.msra.mxu0 0.0
    %313 = vmatprep.subr.mxu0 0.0
    %314 = vmatpush1.msra.mxu0 0.0
    %315 = vmatprep.subr.mxu0 0.0
    %316 = vmatpush1.msra.mxu0 0.0
    %317 = vmatprep.subr.mxu0 0.0
    %318 = vmatpush1.msra.mxu0 0.0
    %319 = vmatprep.subr.mxu0 0.0
    %320 = vmatpush1.msra.mxu0 0.0
    %321 = vmatprep.subr.mxu0 0.0
    %322 = vmatpush1.msra.mxu0 0.0
    %323 = vmatprep.mubr.f32.mxu0 0.0
    %324 = vmatmul.mubr.f32.gmra.mrb[0].mxu0 %v257
    %v325 = vpop.f32.mrb[0].mxu0
    %v326 = vadd.f32 0.0, %v325
    %v327 = vpop.f32.mrb[0].mxu0
    %328 = vdwg.mxu0
    %329 = vmatprep.subr.mxu0 0.0
    %330 = vmatpush1.msra.mxu0 %v248
    %331 = vmatprep.subr.mxu0 0.0
    %332 = vmatpush1.msra.mxu0 %v249
    %333 = vmatprep.subr.mxu0 0.0
    %334 = vmatpush1.msra.mxu0 %v250
    %335 = vmatprep.subr.mxu0 0.0
    %336 = vmatpush1.msra.mxu0 %v251
    %337 = vmatprep.subr.mxu0 0.0
    %338 = vmatpush1.msra.mxu0 0.0
    %339 = vmatprep.subr.mxu0 0.0
    %340 = vmatpush1.msra.mxu0 0.0
    %341 = vmatprep.subr.mxu0 0.0
    %342 = vmatpush1.msra.mxu0 0.0
    %343 = vmatprep.subr.mxu0 0.0
    %344 = vmatpush1.msra.mxu0 0.0
    %345 = vmatprep.subr.mxu0 0.0
    %346 = vmatpush1.msra.mxu0 0.0
    %347 = vmatprep.subr.mxu0 0.0
    %348 = vmatpush1.msra.mxu0 0.0
    %349 = vmatprep.subr.mxu0 0.0
    %350 = vmatpush1.msra.mxu0 0.0
    %351 = vmatprep.subr.mxu0 0.0
    %352 = vmatpush1.msra.mxu0 0.0
    %353 = vmatprep.subr.mxu0 0.0
    %354 = vmatpush1.msra.mxu0 0.0
    %355 = vmatprep.subr.mxu0 0.0
    %356 = vmatpush1.msra.mxu0 0.0
    %357 = vmatprep.subr.mxu0 0.0
    %358 = vmatpush1.msra.mxu0 0.0
    %359 = vmatprep.subr.mxu0 0.0
    %360 = vmatpush1.msra.mxu0 0.0
    %361 = vmatprep.subr.mxu0 0.0
    %362 = vmatpush1.msra.mxu0 0.0
    %363 = vmatprep.subr.mxu0 0.0
    %364 = vmatpush1.msra.mxu0 0.0
    %365 = vmatprep.subr.mxu0 0.0
    %366 = vmatpush1.msra.mxu0 0.0
    %367 = vmatprep.subr.mxu0 0.0
    %368 = vmatpush1.msra.mxu0 0.0
    %369 = vmatprep.subr.mxu0 0.0
    %370 = vmatpush1.msra.mxu0 0.0
    %371 = vmatprep.subr.mxu0 0.0
    %372 = vmatpush1.msra.mxu0 0.0
    %373 = vmatprep.subr.mxu0 0.0
    %374 = vmatpush1.msra.mxu0 0.0
    %375 = vmatprep.subr.mxu0 0.0
    %376 = vmatpush1.msra.mxu0 0.0
    %377 = vmatprep.subr.mxu0 0.0
    %378 = vmatpush1.msra.mxu0 0.0
    %379 = vmatprep.subr.mxu0 0.0
    %380 = vmatpush1.msra.mxu0 0.0
    %381 = vmatprep.subr.mxu0 0.0
    %382 = vmatpush1.msra.mxu0 0.0
    %383 = vmatprep.subr.mxu0 0.0
    %384 = vmatpush1.msra.mxu0 0.0
    %385 = vmatprep.subr.mxu0 0.0
    %386 = vmatpush1.msra.mxu0 0.0
    %387 = vmatprep.subr.mxu0 0.0
    %388 = vmatpush1.msra.mxu0 0.0
    %389 = vmatprep.subr.mxu0 0.0
    %390 = vmatpush1.msra.mxu0 0.0
    %391 = vmatprep.subr.mxu0 0.0
    %392 = vmatpush1.msra.mxu0 0.0
    %393 = vmatprep.mubr.f32.mxu0 0.0
    %394 = vmatmul.mubr.f32.gmra.mrb[0].mxu0 %v134
    %v395 = vpop.f32.mrb[0].mxu0
    %v396 = vadd.f32 %v326, %v395
    %v397 = vpop.f32.mrb[0].mxu0
    %398 = vdwg.mxu0
    %v399 = vld [vmem:[%s8] sm:$0x1]
    %v401 = vlaneseq
    %v402 = vshrl.u32 %v401, 7
    %v403 = vsub.s32 0, %v402
    %v404 = vrot.slane %v399, %v403
    %v406 = vadd.f32 %v396, %v404
    %v407 = vmax.f32 %v406, 0.0
    %v408 = vld [vmem:[%s9] sm:$0xff]
    %v409 = vld [vmem:[%s9 + $0x8] sm:$0xff]
    %v410 = vld [vmem:[%s9 + $0x10] sm:$0xff]
    %v411 = vld [vmem:[%s9 + $0x18] sm:$0xff]
    %v412 = vld [vmem:[%s10] sm:$0x1]
    %v414 = vlaneseq
    %v415 = vshrl.u32 %v414, 7
    %v416 = vsub.s32 0, %v415
    %v417 = vrot.slane %v412, %v416
    %v420 = vsel %vm59, %v407, 0
    %422 = vmatprep.subr.mxu0 0.0
    %423 = vmatpush1.msra.mxu0 %v408
    %424 = vmatprep.subr.mxu0 0.0
    %425 = vmatpush1.msra.mxu0 %v409
    %426 = vmatprep.subr.mxu0 0.0
    %427 = vmatpush1.msra.mxu0 %v410
    %428 = vmatprep.subr.mxu0 0.0
    %429 = vmatpush1.msra.mxu0 %v411
    %430 = vmatprep.subr.mxu0 0.0
    %431 = vmatpush1.msra.mxu0 0.0
    %432 = vmatprep.subr.mxu0 0.0
    %433 = vmatpush1.msra.mxu0 0.0
    %434 = vmatprep.subr.mxu0 0.0
    %435 = vmatpush1.msra.mxu0 0.0
    %436 = vmatprep.subr.mxu0 0.0
    %437 = vmatpush1.msra.mxu0 0.0
    %438 = vmatprep.subr.mxu0 0.0
    %439 = vmatpush1.msra.mxu0 0.0
    %440 = vmatprep.subr.mxu0 0.0
    %441 = vmatpush1.msra.mxu0 0.0
    %442 = vmatprep.subr.mxu0 0.0
    %443 = vmatpush1.msra.mxu0 0.0
    %444 = vmatprep.subr.mxu0 0.0
    %445 = vmatpush1.msra.mxu0 0.0
    %446 = vmatprep.subr.mxu0 0.0
    %447 = vmatpush1.msra.mxu0 0.0
    %448 = vmatprep.subr.mxu0 0.0
    %449 = vmatpush1.msra.mxu0 0.0
    %450 = vmatprep.subr.mxu0 0.0
    %451 = vmatpush1.msra.mxu0 0.0
    %452 = vmatprep.subr.mxu0 0.0
    %453 = vmatpush1.msra.mxu0 0.0
    %454 = vmatprep.subr.mxu0 0.0
    %455 = vmatpush1.msra.mxu0 0.0
    %456 = vmatprep.subr.mxu0 0.0
    %457 = vmatpush1.msra.mxu0 0.0
    %458 = vmatprep.subr.mxu0 0.0
    %459 = vmatpush1.msra.mxu0 0.0
    %460 = vmatprep.subr.mxu0 0.0
    %461 = vmatpush1.msra.mxu0 0.0
    %462 = vmatprep.subr.mxu0 0.0
    %463 = vmatpush1.msra.mxu0 0.0
    %464 = vmatprep.subr.mxu0 0.0
    %465 = vmatpush1.msra.mxu0 0.0
    %466 = vmatprep.subr.mxu0 0.0
    %467 = vmatpush1.msra.mxu0 0.0
    %468 = vmatprep.subr.mxu0 0.0
    %469 = vmatpush1.msra.mxu0 0.0
    %470 = vmatprep.subr.mxu0 0.0
    %471 = vmatpush1.msra.mxu0 0.0
    %472 = vmatprep.subr.mxu0 0.0
    %473 = vmatpush1.msra.mxu0 0.0
    %474 = vmatprep.subr.mxu0 0.0
    %475 = vmatpush1.msra.mxu0 0.0
    %476 = vmatprep.subr.mxu0 0.0
    %477 = vmatpush1.msra.mxu0 0.0
    %478 = vmatprep.subr.mxu0 0.0
    %479 = vmatpush1.msra.mxu0 0.0
    %480 = vmatprep.subr.mxu0 0.0
    %481 = vmatpush1.msra.mxu0 0.0
    %482 = vmatprep.subr.mxu0 0.0
    %483 = vmatpush1.msra.mxu0 0.0
    %484 = vmatprep.subr.mxu0 0.0
    %485 = vmatpush1.msra.mxu0 0.0
    %486 = vmatprep.mubr.f32.mxu0 0.0
    %487 = vmatmul.mubr.f32.gmra.mrb[0].mxu0 %v420
    %v488 = vpop.f32.mrb[0].mxu0
    %v489 = vadd.f32 %v417, %v488
    %v490 = vpop.f32.mrb[0].mxu0
    %491 = vdwg.mxu0
    %v492 = vld [vmem:[%s11] sm:$0xff]
    %v493 = vld [vmem:[%s11 + $0x8] sm:$0xff]
    %v494 = vld [vmem:[%s11 + $0x10] sm:$0xff]
    %v495 = vld [vmem:[%s11 + $0x18] sm:$0xff]
    %v496 = vld [vmem:[%s12] sm:$0x1]
    %v498 = vlaneseq
    %v499 = vshrl.u32 %v498, 7
    %v500 = vsub.s32 0, %v499
    %v501 = vrot.slane %v496, %v500
    %503 = vmatprep.subr.mxu0 0.0
    %504 = vmatpush1.msra.mxu0 %v492
    %505 = vmatprep.subr.mxu0 0.0
    %506 = vmatpush1.msra.mxu0 %v493
    %507 = vmatprep.subr.mxu0 0.0
    %508 = vmatpush1.msra.mxu0 %v494
    %509 = vmatprep.subr.mxu0 0.0
    %510 = vmatpush1.msra.mxu0 %v495
    %511 = vmatprep.subr.mxu0 0.0
    %512 = vmatpush1.msra.mxu0 0.0
    %513 = vmatprep.subr.mxu0 0.0
    %514 = vmatpush1.msra.mxu0 0.0
    %515 = vmatprep.subr.mxu0 0.0
    %516 = vmatpush1.msra.mxu0 0.0
    %517 = vmatprep.subr.mxu0 0.0
    %518 = vmatpush1.msra.mxu0 0.0
    %519 = vmatprep.subr.mxu0 0.0
    %520 = vmatpush1.msra.mxu0 0.0
    %521 = vmatprep.subr.mxu0 0.0
    %522 = vmatpush1.msra.mxu0 0.0
    %523 = vmatprep.subr.mxu0 0.0
    %524 = vmatpush1.msra.mxu0 0.0
    %525 = vmatprep.subr.mxu0 0.0
    %526 = vmatpush1.msra.mxu0 0.0
    %527 = vmatprep.subr.mxu0 0.0
    %528 = vmatpush1.msra.mxu0 0.0
    %529 = vmatprep.subr.mxu0 0.0
    %530 = vmatpush1.msra.mxu0 0.0
    %531 = vmatprep.subr.mxu0 0.0
    %532 = vmatpush1.msra.mxu0 0.0
    %533 = vmatprep.subr.mxu0 0.0
    %534 = vmatpush1.msra.mxu0 0.0
    %535 = vmatprep.subr.mxu0 0.0
    %536 = vmatpush1.msra.mxu0 0.0
    %537 = vmatprep.subr.mxu0 0.0
    %538 = vmatpush1.msra.mxu0 0.0
    %539 = vmatprep.subr.mxu0 0.0
    %540 = vmatpush1.msra.mxu0 0.0
    %541 = vmatprep.subr.mxu0 0.0
    %542 = vmatpush1.msra.mxu0 0.0
    %543 = vmatprep.subr.mxu0 0.0
    %544 = vmatpush1.msra.mxu0 0.0
    %545 = vmatprep.subr.mxu0 0.0
    %546 = vmatpush1.msra.mxu0 0.0
    %547 = vmatprep.subr.mxu0 0.0
    %548 = vmatpush1.msra.mxu0 0.0
    %549 = vmatprep.subr.mxu0 0.0
    %550 = vmatpush1.msra.mxu0 0.0
    %551 = vmatprep.subr.mxu0 0.0
    %552 = vmatpush1.msra.mxu0 0.0
    %553 = vmatprep.subr.mxu0 0.0
    %554 = vmatpush1.msra.mxu0 0.0
    %555 = vmatprep.subr.mxu0 0.0
    %556 = vmatpush1.msra.mxu0 0.0
    %557 = vmatprep.subr.mxu0 0.0
    %558 = vmatpush1.msra.mxu0 0.0
    %559 = vmatprep.subr.mxu0 0.0
    %560 = vmatpush1.msra.mxu0 0.0
    %561 = vmatprep.subr.mxu0 0.0
    %562 = vmatpush1.msra.mxu0 0.0
    %563 = vmatprep.subr.mxu0 0.0
    %564 = vmatpush1.msra.mxu0 0.0
    %565 = vmatprep.subr.mxu0 0.0
    %566 = vmatpush1.msra.mxu0 0.0
    %567 = vmatprep.mubr.f32.mxu0 0.0
    %568 = vmatmul.mubr.f32.gmra.mrb[0].mxu0 %v61
    %v569 = vpop.f32.mrb[0].mxu0
    %v570 = vadd.f32 %v501, %v569
    %v571 = vpop.f32.mrb[0].mxu0
    %572 = vdwg.mxu0
    %v573 = vadd.f32 %v489, %v570
    %v574 = vxor.u32 %v573, 2147483648
    %v575 = vmul.f32 %v574, 1.442695
    %v576 = vpow.pop %v575
    %v577 = vadd.f32 %v576, 1.0
    %v578 = vrcp.pop %v577
    %v579 = vmul.f32 1.0, %v578
    %581 = vrot.lane.b32.xlu0 %v570, 64
    %v582 = vpop.permute.xlu0 %581
    %v584 = vmul.f32 %v579, %v582
    %586 = vrot.lane.b32.xlu0 %v584, 64
    %v587 = vpop.permute.xlu0 %586
    %v589 = vadd.f32 %v489, %v587
    %v590 = vtanh.pop %v589
    %v591 = vsub.f32 1.0, %v579
    %593 = vrot.lane.b32.xlu0 %v590, 96
    %v594 = vpop.permute.xlu0 %593
    %v596 = vmul.f32 %v591, %v594
    %597 = vrot.lane.b32.xlu0 %v48, 32
    %v598 = vpop.permute.xlu0 %597
    %v600 = vmul.f32 %v579, %v598
    %v601 = vadd.f32 %v596, %v600
    %603 = vrot.lane.b32.xlu0 %v601, 96
    %v604 = vpop.permute.xlu0 %603
    %vm606 = vcmask 254976
    %607 = vst.msk [vmem:[%s13] sm:$0x3] %vm606, %v604
    // Predicated region
    $region54: #{_decoder_rnn_forward_impl.2} parent=1 // pred_check
      _
    $region55: #{_decoder_rnn_forward_impl.2} parent=1 // pred_check_branch
      %609 = sbr.rel (0) target = $region57
    $region56: #{_decoder_rnn_forward_impl.2} parent=1 // pred_region
      _
    $region57: #{_decoder_rnn_forward_impl.2} parent=1 // pred_fallthru
      _
    // Predicated region
    $region58: #{_decoder_rnn_forward_impl.2} parent=1 // pred_check
      _
    $region59: #{_decoder_rnn_forward_impl.2} parent=1 // pred_check_branch
      %611 = sbr.rel (0) target = $region61
    $region60: #{_decoder_rnn_forward_impl.2} parent=1 // pred_region
      %s613 = ssub.s32 32, 32
      %614 = vsyncadd [#allocation3], %s613
      %s616 = sshll.u32 [#allocation2], 4
      %s617 = int_to_ptr.vmem [resolvable:$true] %s616
      %619 = dma.vmem_to_hbm [thread:$0]  %s617, 32, %s14, [#allocation3]
    $region61: #{_decoder_rnn_forward_impl.2} parent=1 // pred_fallthru
      _
    // Predicated region
    $region62: #{_decoder_rnn_forward_impl.2} parent=1 // pred_check
      _
    $region63: #{_decoder_rnn_forward_impl.2} parent=1 // pred_check_branch
      %621 = sbr.rel (0) target = $region65
    $region64: #{_decoder_rnn_forward_impl.2} parent=1 // pred_region
      _
    $region65: #{_decoder_rnn_forward_impl.2} parent=1 // pred_fallthru
      _
    // Predicated region
    $region66: #{_decoder_rnn_forward_impl.2} parent=1 // pred_check
      _
    $region67: #{_decoder_rnn_forward_impl.2} parent=1 // pred_check_branch
      %623 = sbr.rel (0) target = $region69
    $region68: #{_decoder_rnn_forward_impl.2} parent=1 // pred_region
      %624 = dma.done [#allocation3], 32
    $region69: #{_decoder_rnn_forward_impl.2} parent=1 // pred_fallthru
      _
    %625 = vsyncpa [#allocation3], 1

// kernel: _decoder_rnn_forward_impl.3
$region0: #{_decoder_rnn_forward_impl.3}
  #allocation0 [shape = 'u32[]', space=smem, size = 0x4, offset = 0x4, fixed_abs, tag = 'smem constant byte address 0x4 - core index']
  #allocation1 [shape = 'u32[144,128]{1,0:T(1,128)}', space=vmem, size = 0x12000, scoped, tag = 'internal scratch']
  %s0 = inlined_call_operand.vmem [shape: f32[2,32], index: 0, kind: input, shape index: {}]
  %s1 = inlined_call_operand.vmem [shape: bf16[32,4096], index: 1, kind: input, shape index: {}]
  %s2 = inlined_call_operand.vmem [shape: f32[1,4096], index: 2, kind: input, shape index: {}]
  %s3 = inlined_call_operand.vmem [shape: f32[2,4096], index: 3, kind: output, shape index: {0}]
  %s4 = inlined_call_operand.vmem [shape: f32[4,2,1], index: 4, kind: output, shape index: {1}]
  %s5 = inlined_call_operand.vmem [shape: f32[4,2,1], index: 5, kind: output, shape index: {2}]
  %6 = xla_tuple %s3, %s4, %s5
  %s7 = sld [smem:[#allocation0]]
  $region84: #{_decoder_rnn_forward_impl.3} parent=0
    _
  %s9 = ssub.s32 1, %s7
  %s10 = scalar_select 0, %s9, %s7
  $region1: #{_decoder_rnn_forward_impl.3} parent=0
    #allocation2 [shape = 'u8[131072]{0}', space=vmem, size = 0x20000, scoped, tag = 'input window, operand 1']
    loop: start=0, step=1, limit=6
    $region2: #{_decoder_rnn_forward_impl.3} parent=1 // loop_pre_header
      _
    $region3: #{_decoder_rnn_forward_impl.3} parent=1 // loop_header
      %s12 = sphi 0, %s16
      %p13 = scmp.ge.s32.totalorder %s12, 6
      %s20 = sphi 0, %s20
      %s22 = sphi 0, %s20
      %s23 = sphi 0, %s22
      %s37 = sphi 0, %s23
      %s43 = sphi 0, %s45
      %s46 = sphi 0, %s43
      %s47 = sphi 0, %s46
      %s63 = sphi 0, %s47
      %s69 = sphi 0, %s71
      %s72 = sphi 0, %s69
      %s73 = sphi 0, %s72
      %s89 = sphi 0, %s73
      %s95 = sphi 0, %s97
      %s98 = sphi 0, %s95
      %s99 = sphi 0, %s98
      %s115 = sphi 0, %s99
      %s121 = sphi 0, %s123
      %s124 = sphi 0, %s121
      %s125 = sphi 0, %s124
      %s141 = sphi 0, %s125
      %s147 = sphi 0, %s149
      %s150 = sphi 0, %s147
      %s151 = sphi 0, %s150
      %s167 = sphi 0, %s151
    $region4: #{_decoder_rnn_forward_impl.3} parent=1 // loop_header_branch
      %15 = sbr.rel (%p13) target = $region8
    $region5: #{_decoder_rnn_forward_impl.3} parent=1 // loop_body
      %s17 = ssub.s32 %s12, 1
      %s18 = ssub.s32 %s12, 2
      %s19 = sadd.s32 %s12, 1
      %s21 = sadd.s32 %s20, 1
      %p24 = scmp.eq.s32.totalorder %s12, 3
      %p25 = scmp.ne.s32.totalorder %s20, %s22
      %p26 = scmp.eq.s32.totalorder %s12, 0
      %p27 = por %p25, %p26
      %p28 = scmp.ne.s32.totalorder %s20, %s22
      %p29 = scmp.eq.s32.totalorder %s17, 3
      %p30 = por %p28, %p29
      %p31 = scmp.ne.s32.totalorder %s22, %s23
      %p32 = scmp.eq.s32.totalorder %s17, 0
      %p33 = por %p31, %p32
      %p34 = scmp.ne.s32.totalorder %s22, %s23
      %p35 = scmp.eq.s32.totalorder %s18, 3
      %p36 = por %p34, %p35
      %p38 = scmp.ne.s32.totalorder %s23, %s37
      %p39 = scmp.eq.s32.totalorder %s18, 0
      %p40 = por %p38, %p39
      %s41 = ssub.s32 %s12, %s19
      %p42 = scmp.eq.s32.totalorder %s41, 0
      %s44 = sadd.s32 %s43, 1
      %s45 = scalar_select %p42, %s43, %s44
      %p48 = pneg %p42
      %p49 = scmp.eq.s32.totalorder %s12, 3
      %p50 = por %p48, %p49
      %p51 = scmp.ne.s32.totalorder %s43, %s46
      %p52 = scmp.eq.s32.totalorder %s12, 0
      %p53 = por %p51, %p52
      %p54 = scmp.ne.s32.totalorder %s43, %s46
      %p55 = scmp.eq.s32.totalorder %s17, 3
      %p56 = por %p54, %p55
      %p57 = scmp.ne.s32.totalorder %s46, %s47
      %p58 = scmp.eq.s32.totalorder %s17, 0
      %p59 = por %p57, %p58
      %p60 = scmp.ne.s32.totalorder %s46, %s47
      %p61 = scmp.eq.s32.totalorder %s18, 3
      %p62 = por %p60, %p61
      %p64 = scmp.ne.s32.totalorder %s47, %s63
      %p65 = scmp.eq.s32.totalorder %s18, 0
      %p66 = por %p64, %p65
      %s67 = ssub.s32 %s12, %s19
      %p68 = scmp.eq.s32.totalorder %s67, 0
      %s70 = sadd.s32 %s69, 1
      %s71 = scalar_select %p68, %s69, %s70
      %p74 = pneg %p68
      %p75 = scmp.eq.s32.totalorder %s12, 3
      %p76 = por %p74, %p75
      %p77 = scmp.ne.s32.totalorder %s69, %s72
      %p78 = scmp.eq.s32.totalorder %s12, 0
      %p79 = por %p77, %p78
      %p80 = scmp.ne.s32.totalorder %s69, %s72
      %p81 = scmp.eq.s32.totalorder %s17, 3
      %p82 = por %p80, %p81
      %p83 = scmp.ne.s32.totalorder %s72, %s73
      %p84 = scmp.eq.s32.totalorder %s17, 0
      %p85 = por %p83, %p84
      %p86 = scmp.ne.s32.totalorder %s72, %s73
      %p87 = scmp.eq.s32.totalorder %s18, 3
      %p88 = por %p86, %p87
      %p90 = scmp.ne.s32.totalorder %s73, %s89
      %p91 = scmp.eq.s32.totalorder %s18, 0
      %p92 = por %p90, %p91
      %s93 = ssub.s32 %s12, %s19
      %p94 = scmp.eq.s32.totalorder %s93, 0
      %s96 = sadd.s32 %s95, 1
      %s97 = scalar_select %p94, %s95, %s96
      %p100 = pneg %p94
      %p101 = scmp.eq.s32.totalorder %s12, 3
      %p102 = por %p100, %p101
      %p103 = scmp.ne.s32.totalorder %s95, %s98
      %p104 = scmp.eq.s32.totalorder %s12, 0
      %p105 = por %p103, %p104
      %p106 = scmp.ne.s32.totalorder %s95, %s98
      %p107 = scmp.eq.s32.totalorder %s17, 3
      %p108 = por %p106, %p107
      %p109 = scmp.ne.s32.totalorder %s98, %s99
      %p110 = scmp.eq.s32.totalorder %s17, 0
      %p111 = por %p109, %p110
      %p112 = scmp.ne.s32.totalorder %s98, %s99
      %p113 = scmp.eq.s32.totalorder %s18, 3
      %p114 = por %p112, %p113
      %p116 = scmp.ne.s32.totalorder %s99, %s115
      %p117 = scmp.eq.s32.totalorder %s18, 0
      %p118 = por %p116, %p117
      %s119 = ssub.s32 %s12, %s19
      %p120 = scmp.eq.s32.totalorder %s119, 0
      %s122 = sadd.s32 %s121, 1
      %s123 = scalar_select %p120, %s121, %s122
      %p126 = pneg %p120
      %p127 = scmp.eq.s32.totalorder %s12, 3
      %p128 = por %p126, %p127
      %p129 = scmp.ne.s32.totalorder %s121, %s124
      %p130 = scmp.eq.s32.totalorder %s12, 0
      %p131 = por %p129, %p130
      %p132 = scmp.ne.s32.totalorder %s121, %s124
      %p133 = scmp.eq.s32.totalorder %s17, 3
      %p134 = por %p132, %p133
      %p135 = scmp.ne.s32.totalorder %s124, %s125
      %p136 = scmp.eq.s32.totalorder %s17, 0
      %p137 = por %p135, %p136
      %p138 = scmp.ne.s32.totalorder %s124, %s125
      %p139 = scmp.eq.s32.totalorder %s18, 3
      %p140 = por %p138, %p139
      %p142 = scmp.ne.s32.totalorder %s125, %s141
      %p143 = scmp.eq.s32.totalorder %s18, 0
      %p144 = por %p142, %p143
      %s145 = ssub.s32 %s12, %s19
      %p146 = scmp.eq.s32.totalorder %s145, 0
      %s148 = sadd.s32 %s147, 1
      %s149 = scalar_select %p146, %s147, %s148
      %p152 = pneg %p146
      %p153 = scmp.eq.s32.totalorder %s12, 3
      %p154 = por %p152, %p153
      %p155 = scmp.ne.s32.totalorder %s147, %s150
      %p156 = scmp.eq.s32.totalorder %s12, 0
      %p157 = por %p155, %p156
      %p158 = scmp.ne.s32.totalorder %s147, %s150
      %p159 = scmp.eq.s32.totalorder %s17, 3
      %p160 = por %p158, %p159
      %p161 = scmp.ne.s32.totalorder %s150, %s151
      %p162 = scmp.eq.s32.totalorder %s17, 0
      %p163 = por %p161, %p162
      %p164 = scmp.ne.s32.totalorder %s150, %s151
      %p165 = scmp.eq.s32.totalorder %s18, 3
      %p166 = por %p164, %p165
      %p168 = scmp.ne.s32.totalorder %s151, %s167
      %p169 = scmp.eq.s32.totalorder %s18, 0
      %p170 = por %p168, %p169
      %p171 = scmp.le.s32.totalorder 1, %s12
      %p172 = scmp.lt.s32.totalorder %s12, 5
      %p173 = pnand %p171, %p172
      %p174 = pneg %p173
      // Predicated region
      $region9: #{_decoder_rnn_forward_impl.3} parent=5 // pred_check
        _
      $region10: #{_decoder_rnn_forward_impl.3} parent=5 // pred_check_branch
        %176 = sbr.rel (%p173) target = $region12
      $region11: #{_decoder_rnn_forward_impl.3} parent=5 // pred_region
        %s177 = ssub.s32 %s12, 1
        // Predicated region
        $region13: #{_decoder_rnn_forward_impl.3} parent=11 // pred_check
          %p178 = pneg %p33
        $region14: #{_decoder_rnn_forward_impl.3} parent=11 // pred_check_branch
          %180 = sbr.rel (%p178) target = $region16
        $region15: #{_decoder_rnn_forward_impl.3} parent=11 // pred_region
          _
        $region16: #{_decoder_rnn_forward_impl.3} parent=11 // pred_fallthru
          _
      $region12: #{_decoder_rnn_forward_impl.3} parent=5 // pred_fallthru
        _
      %p181 = scmp.lt.s32.totalorder %s12, 4
      // Predicated region
      $region17: #{_decoder_rnn_forward_impl.3} parent=5 // pred_check
        %p182 = pneg %p181
      $region18: #{_decoder_rnn_forward_impl.3} parent=5 // pred_check_branch
        %184 = sbr.rel (%p182) target = $region20
      $region19: #{_decoder_rnn_forward_impl.3} parent=5 // pred_region
        // Predicated region
        $region21: #{_decoder_rnn_forward_impl.3} parent=19 // pred_check
          %p185 = pneg %p53
        $region22: #{_decoder_rnn_forward_impl.3} parent=19 // pred_check_branch
          %187 = sbr.rel (%p185) target = $region24
        $region23: #{_decoder_rnn_forward_impl.3} parent=19 // pred_region
          %s188 = sand.u32 %s43, 1
          %s189 = sand.u32 %s43, 1
          %s190 = smul.addr %s189, 128
          %s191 = scalar_lea.vmem [#allocation2], %s190
          %s192 = smul.u32 8, %s12
          %s193 = smul.addr %s192, 4
          %s194 = scalar_lea.vmem %s1, %s193
          // Predicated region
          $region25: #{_decoder_rnn_forward_impl.3} parent=23 // pred_check
            _
          $region26: #{_decoder_rnn_forward_impl.3} parent=23 // pred_check_branch
            %196 = sbr.rel (0) target = $region28
          $region27: #{_decoder_rnn_forward_impl.3} parent=23 // pred_region
            // Predicated region
            $region29: #{_decoder_rnn_forward_impl.3} parent=27 // pred_check
              _
            $region30: #{_decoder_rnn_forward_impl.3} parent=27 // pred_check_branch
              %198 = sbr.rel (0) target = $region32
            $region31: #{_decoder_rnn_forward_impl.3} parent=27 // pred_region
              loop: start=0, step=1, limit=1
              $region33: #{_decoder_rnn_forward_impl.3} parent=31 // loop_pre_header
                _
              $region34: #{_decoder_rnn_forward_impl.3} parent=31 // loop_header
                %s200 = sphi 0, %s204
                %p201 = scmp.ge.s32.totalorder %s200, 1
                %s205 = sphi %s194, %s194
                %s206 = sphi %s191, %s191
              $region35: #{_decoder_rnn_forward_impl.3} parent=31 // loop_header_branch
                %203 = sbr.rel (%p201) target = $region39
              $region36: #{_decoder_rnn_forward_impl.3} parent=31 // loop_body
                %v207 = vld [vmem:[%s205] sm:$0xff]
                %208 = vst [vmem:[%s206] sm:$0xff] %v207
                %v209 = vld [vmem:[%s205 + $0x8] sm:$0xff]
                %210 = vst [vmem:[%s206 + $0x8] sm:$0xff] %v209
                %v211 = vld [vmem:[%s205 + $0x10] sm:$0xff]
                %212 = vst [vmem:[%s206 + $0x10] sm:$0xff] %v211
                %v213 = vld [vmem:[%s205 + $0x18] sm:$0xff]
                %214 = vst [vmem:[%s206 + $0x18] sm:$0xff] %v213
                %v215 = vld [vmem:[%s205 + $0x80] sm:$0xff]
                %216 = vst [vmem:[%s206 + $0x20] sm:$0xff] %v215
                %v217 = vld [vmem:[%s205 + $0x88] sm:$0xff]
                %218 = vst [vmem:[%s206 + $0x28] sm:$0xff] %v217
                %v219 = vld [vmem:[%s205 + $0x90] sm:$0xff]
                %220 = vst [vmem:[%s206 + $0x30] sm:$0xff] %v219
                %v221 = vld [vmem:[%s205 + $0x98] sm:$0xff]
                %222 = vst [vmem:[%s206 + $0x38] sm:$0xff] %v221
                %v223 = vld [vmem:[%s205 + $0x100] sm:$0xff]
                %224 = vst [vmem:[%s206 + $0x40] sm:$0xff] %v223
                %v225 = vld [vmem:[%s205 + $0x108] sm:$0xff]
                %226 = vst [vmem:[%s206 + $0x48] sm:$0xff] %v225
                %v227 = vld [vmem:[%s205 + $0x110] sm:$0xff]
                %228 = vst [vmem:[%s206 + $0x50] sm:$0xff] %v227
                %v229 = vld [vmem:[%s205 + $0x118] sm:$0xff]
                %230 = vst [vmem:[%s206 + $0x58] sm:$0xff] %v229
                %v231 = vld [vmem:[%s205 + $0x180] sm:$0xff]
                %232 = vst [vmem:[%s206 + $0x60] sm:$0xff] %v231
                %v233 = vld [vmem:[%s205 + $0x188] sm:$0xff]
                %234 = vst [vmem:[%s206 + $0x68] sm:$0xff] %v233
                %v235 = vld [vmem:[%s205 + $0x190] sm:$0xff]
                %236 = vst [vmem:[%s206 + $0x70] sm:$0xff] %v235
                %v237 = vld [vmem:[%s205 + $0x198] sm:$0xff]
                %238 = vst [vmem:[%s206 + $0x78] sm:$0xff] %v237
              $region37: #{_decoder_rnn_forward_impl.3} parent=31 // loop_footer
                %s204 = sadd.s32 1, %s200
              $region38: #{_decoder_rnn_forward_impl.3} parent=31 // loop_footer_branch
                %199 = sbr.rel target = $region34
              $region39: #{_decoder_rnn_forward_impl.3} parent=31 // loop_exit
                _
            $region32: #{_decoder_rnn_forward_impl.3} parent=27 // pred_fallthru
              _
            // Predicated region
            $region40: #{_decoder_rnn_forward_impl.3} parent=27 // pred_check
              _
            $region41: #{_decoder_rnn_forward_impl.3} parent=27 // pred_check_branch
              %240 = sbr.rel target = $region43
            $region42: #{_decoder_rnn_forward_impl.3} parent=27 // pred_region
              _
            $region43: #{_decoder_rnn_forward_impl.3} parent=27 // pred_fallthru
              _
          $region28: #{_decoder_rnn_forward_impl.3} parent=23 // pred_fallthru
            _
          %241 = vnop
        $region24: #{_decoder_rnn_forward_impl.3} parent=19 // pred_fallthru
          _
        // Predicated region
        $region44: #{_decoder_rnn_forward_impl.3} parent=19 // pred_check
          %p242 = pneg %p79
        $region45: #{_decoder_rnn_forward_impl.3} parent=19 // pred_check_branch
          %244 = sbr.rel (%p242) target = $region47
        $region46: #{_decoder_rnn_forward_impl.3} parent=19 // pred_region
          %s245 = smul.u32 8, %s12
          %p246 = scmp.lt.s32.totalorder %s245, 31
          %s247 = scalar_select %p246, %s245, 31
          %s248 = scalar_lea.vmem %s2, %s247
          %s249 = smul.u32 8, %s12
        $region47: #{_decoder_rnn_forward_impl.3} parent=19 // pred_fallthru
          _
      $region20: #{_decoder_rnn_forward_impl.3} parent=5 // pred_fallthru
        _
      %p250 = scmp.le.s32.totalorder 1, %s12
      %p251 = scmp.lt.s32.totalorder %s12, 5
      %p252 = pnand %p250, %p251
      %p253 = pneg %p252
      // Predicated region
      $region48: #{_decoder_rnn_forward_impl.3} parent=5 // pred_check
        _
      $region49: #{_decoder_rnn_forward_impl.3} parent=5 // pred_check_branch
        %255 = sbr.rel (%p252) target = $region51
      $region50: #{_decoder_rnn_forward_impl.3} parent=5 // pred_region
        %s256 = ssub.s32 %s12, 1
        %s257 = sand.u32 %s46, 1
        %s258 = sand.u32 %s46, 1
        %s259 = smul.addr %s258, 128
        %s260 = scalar_lea.vmem [#allocation2], %s259
        // Predicated region
        $region52: #{_decoder_rnn_forward_impl.3} parent=50 // pred_check
          %p261 = pneg %p59
        $region53: #{_decoder_rnn_forward_impl.3} parent=50 // pred_check_branch
          %263 = sbr.rel (%p261) target = $region55
        $region54: #{_decoder_rnn_forward_impl.3} parent=50 // pred_region
          _
        $region55: #{_decoder_rnn_forward_impl.3} parent=50 // pred_fallthru
          _
        %p264 = pneg %p33
        %p265 = pneg %p30
        %s266 = sand.u32 %s46, 1
        %s267 = sand.u32 %s46, 1
        %s268 = smul.addr %s267, 128
        %s269 = scalar_lea.vmem [#allocation2], %s268
        %p270 = pneg %p59
        %p271 = pneg %p56
        %s272 = smul.u32 8, %s17
        %p273 = scmp.lt.s32.totalorder %s272, 31
        %s274 = scalar_select %p273, %s272, 31
        %s275 = scalar_lea.vmem %s2, %s274
        %p276 = pneg %p85
        %p277 = pneg %p82
        %p278 = pneg %p111
        %p279 = pneg %p108
        %s280 = smul.u32 8, %s17
        %p281 = scmp.lt.s32.totalorder %s280, 31
        %s282 = scalar_select %p281, %s280, 31
        %s283 = smul.addr %s282, 2
        %s284 = scalar_lea.vmem %s3, %s283
        %p285 = pneg %p137
        %p286 = pneg %p134
        %p287 = scmp.lt.s32.totalorder %s17, 3
        %s288 = scalar_select %p287, %s17, 3
        %s289 = smul.addr %s288, 2
        %s290 = scalar_lea.vmem %s4, %s289
        %p291 = pneg %p163
        %p292 = pneg %p160
        %p293 = scmp.lt.s32.totalorder %s17, 3
        %s294 = scalar_select %p293, %s17, 3
        %s295 = smul.addr %s294, 2
        %s296 = scalar_lea.vmem %s5, %s295
        %s297 = smul.u32 8, %s17
        %s298 = smul.u32 8, %s17
        %p299 = scmp.lt.s32.totalorder %s298, 31
        %s300 = scalar_select %p299, %s298, 31
        %s301 = scalar_lea.vmem %s2, %s300
        %s302 = smul.u32 8, %s17
        %s303 = smul.u32 8, %s17
        %p304 = scmp.lt.s32.totalorder %s303, 31
        %s305 = scalar_select %p304, %s303, 31
        %s306 = smul.addr %s305, 2
        %s307 = scalar_lea.vmem %s3, %s306
        %s308 = smul.u32 8, %s17
        %p309 = scmp.lt.s32.totalorder %s17, 3
        %s310 = scalar_select %p309, %s17, 3
        %s311 = smul.addr %s310, 2
        %s312 = scalar_lea.vmem %s4, %s311
        %p313 = scmp.lt.s32.totalorder %s17, 3
        %s314 = scalar_select %p313, %s17, 3
        %s315 = smul.addr %s314, 2
        %s316 = scalar_lea.vmem %s5, %s315
        %v317 = vld [vmem:[%s0] sm:$0x3]
        %v318 = vld [vmem:[%s260] sm:$0xff]
        %v319 = vld [vmem:[%s260 + $0x8] sm:$0xff]
        %v320 = vld [vmem:[%s260 + $0x10] sm:$0xff]
        %v321 = vld [vmem:[%s260 + $0x18] sm:$0xff]
        %v322 = vld [vmem:[%s260 + $0x20] sm:$0xff]
        %v323 = vld [vmem:[%s260 + $0x28] sm:$0xff]
        %v324 = vld [vmem:[%s260 + $0x30] sm:$0xff]
        %v325 = vld [vmem:[%s260 + $0x38] sm:$0xff]
        %v326 = vld [vmem:[%s260 + $0x40] sm:$0xff]
        %v327 = vld [vmem:[%s260 + $0x48] sm:$0xff]
        %v328 = vld [vmem:[%s260 + $0x50] sm:$0xff]
        %v329 = vld [vmem:[%s260 + $0x58] sm:$0xff]
        %v330 = vld [vmem:[%s260 + $0x60] sm:$0xff]
        %v331 = vld [vmem:[%s260 + $0x68] sm:$0xff]
        %v332 = vld [vmem:[%s260 + $0x70] sm:$0xff]
        %v333 = vld [vmem:[%s260 + $0x78] sm:$0xff]
        %v334 = vunpack.c.l.bf16 %v318
        %v335 = vunpack.c.h.bf16 %v318
        %v336 = vunpack.c.l.bf16 %v319
        %v337 = vunpack.c.h.bf16 %v319
        %v338 = vunpack.c.l.bf16 %v320
        %v339 = vunpack.c.h.bf16 %v320
        %v340 = vunpack.c.l.bf16 %v321
        %v341 = vunpack.c.h.bf16 %v321
        %v342 = vunpack.c.l.bf16 %v322
        %v343 = vunpack.c.h.bf16 %v322
        %v344 = vunpack.c.l.bf16 %v323
        %v345 = vunpack.c.h.bf16 %v323
        %v346 = vunpack.c.l.bf16 %v324
        %v347 = vunpack.c.h.bf16 %v324
        %v348 = vunpack.c.l.bf16 %v325
        %v349 = vunpack.c.h.bf16 %v325
        %v350 = vunpack.c.l.bf16 %v326
        %v351 = vunpack.c.h.bf16 %v326
        %v352 = vunpack.c.l.bf16 %v327
        %v353 = vunpack.c.h.bf16 %v327
        %v354 = vunpack.c.l.bf16 %v328
        %v355 = vunpack.c.h.bf16 %v328
        %v356 = vunpack.c.l.bf16 %v329
        %v357 = vunpack.c.h.bf16 %v329
        %v358 = vunpack.c.l.bf16 %v330
        %v359 = vunpack.c.h.bf16 %v330
        %v360 = vunpack.c.l.bf16 %v331
        %v361 = vunpack.c.h.bf16 %v331
        %v362 = vunpack.c.l.bf16 %v332
        %v363 = vunpack.c.h.bf16 %v332
        %v364 = vunpack.c.l.bf16 %v333
        %v365 = vunpack.c.h.bf16 %v333
        %v366 = vld [vmem:[%s301] sm:$0xff]
        %v368 = vlaneseq
        %v369 = vshrl.u32 %v368, 7
        %v370 = vsub.s32 0, %v369
        %v371 = vrot.slane %v366, %v370
        %v372 = vlaneseq
        %v373 = vshrl.u32 %v372, 7
        %v374 = vsub.s32 1, %v373
        %v375 = vrot.slane %v366, %v374
        %v376 = vlaneseq
        %v377 = vshrl.u32 %v376, 7
        %v378 = vsub.s32 2, %v377
        %v379 = vrot.slane %v366, %v378
        %v380 = vlaneseq
        %v381 = vshrl.u32 %v380, 7
        %v382 = vsub.s32 3, %v381
        %v383 = vrot.slane %v366, %v382
        %v384 = vlaneseq
        %v385 = vshrl.u32 %v384, 7
        %v386 = vsub.s32 4, %v385
        %v387 = vrot.slane %v366, %v386
        %v388 = vlaneseq
        %v389 = vshrl.u32 %v388, 7
        %v390 = vsub.s32 5, %v389
        %v391 = vrot.slane %v366, %v390
        %v392 = vlaneseq
        %v393 = vshrl.u32 %v392, 7
        %v394 = vsub.s32 6, %v393
        %v395 = vrot.slane %v366, %v394
        %v396 = vlaneseq
        %v397 = vshrl.u32 %v396, 7
        %v398 = vsub.s32 7, %v397
        %v399 = vrot.slane %v366, %v398
        %vm408 = vcmask 261120
        %v410 = vsel %vm408, %v317, 0
        %412 = vmatprep.subr.mxu0 %v335
        %413 = vmatpush1.msra.mxu0 %v334
        %414 = vmatprep.subr.mxu0 %v343
        %415 = vmatpush1.msra.mxu0 %v342
        %416 = vmatprep.subr.mxu0 %v351
        %417 = vmatpush1.msra.mxu0 %v350
        %418 = vmatprep.subr.mxu0 %v359
        %419 = vmatpush1.msra.mxu0 %v358
        %420 = vmatprep.subr.mxu0 0.0
        %421 = vmatpush1.msra.mxu0 0.0
        %422 = vmatprep.subr.mxu0 0.0
        %423 = vmatpush1.msra.mxu0 0.0
        %424 = vmatprep.subr.mxu0 0.0
        %425 = vmatpush1.msra.mxu0 0.0
        %426 = vmatprep.subr.mxu0 0.0
        %427 = vmatpush1.msra.mxu0 0.0
        %428 = vmatprep.subr.mxu0 0.0
        %429 = vmatpush1.msra.mxu0 0.0
        %430 = vmatprep.subr.mxu0 0.0
        %431 = vmatpush1.msra.mxu0 0.0
        %432 = vmatprep.subr.mxu0 0.0
        %433 = vmatpush1.msra.mxu0 0.0
        %434 = vmatprep.subr.mxu0 0.0
        %435 = vmatpush1.msra.mxu0 0.0
        %436 = vmatprep.subr.mxu0 0.0
        %437 = vmatpush1.msra.mxu0 0.0
        %438 = vmatprep.subr.mxu0 0.0
        %439 = vmatpush1.msra.mxu0 0.0
        %440 = vmatprep.subr.mxu0 0.0
        %441 = vmatpush1.msra.mxu0 0.0
        %442 = vmatprep.subr.mxu0 0.0
        %443 = vmatpush1.msra.mxu0 0.0
        %444 = vmatprep.subr.mxu0 0.0
        %445 = vmatpush1.msra.mxu0 0.0
        %446 = vmatprep.subr.mxu0 0.0
        %447 = vmatpush1.msra.mxu0 0.0
        %448 = vmatprep.subr.mxu0 0.0
        %449 = vmatpush1.msra.mxu0 0.0
        %450 = vmatprep.subr.mxu0 0.0
        %451 = vmatpush1.msra.mxu0 0.0
        %452 = vmatprep.subr.mxu0 0.0
        %453 = vmatpush1.msra.mxu0 0.0
        %454 = vmatprep.subr.mxu0 0.0
        %455 = vmatpush1.msra.mxu0 0.0
        %456 = vmatprep.subr.mxu0 0.0
        %457 = vmatpush1.msra.mxu0 0.0
        %458 = vmatprep.subr.mxu0 0.0
        %459 = vmatpush1.msra.mxu0 0.0
        %460 = vmatprep.subr.mxu0 0.0
        %461 = vmatpush1.msra.mxu0 0.0
        %462 = vmatprep.subr.mxu0 0.0
        %463 = vmatpush1.msra.mxu0 0.0
        %464 = vmatprep.subr.mxu0 0.0
        %465 = vmatpush1.msra.mxu0 0.0
        %466 = vmatprep.subr.mxu0 0.0
        %467 = vmatpush1.msra.mxu0 0.0
        %468 = vmatprep.subr.mxu0 0.0
        %469 = vmatpush1.msra.mxu0 0.0
        %470 = vmatprep.subr.mxu0 0.0
        %471 = vmatpush1.msra.mxu0 0.0
        %472 = vmatprep.subr.mxu0 0.0
        %473 = vmatpush1.msra.mxu0 0.0
        %474 = vmatprep.subr.mxu0 0.0
        %475 = vmatpush1.msra.mxu0 0.0
        %476 = vmatprep.mubr.f32.mxu0 0.0
        %477 = vmatmul.mubr.f32.gmra.mrb[0].mxu0 %v410
        %v478 = vpop.f32.mrb[0].mxu0
        %v479 = vadd.f32 %v371, %v478
        %v480 = vpop.f32.mrb[0].mxu0
        %v481 = vadd.f32 %v375, %v480
        %482 = vdwg.mxu0
        %483 = vmatprep.subr.mxu0 %v337
        %484 = vmatpush1.msra.mxu0 %v336
        %485 = vmatprep.subr.mxu0 %v345
        %486 = vmatpush1.msra.mxu0 %v344
        %487 = vmatprep.subr.mxu0 %v353
        %488 = vmatpush1.msra.mxu0 %v352
        %489 = vmatprep.subr.mxu0 %v361
        %490 = vmatpush1.msra.mxu0 %v360
        %491 = vmatprep.subr.mxu0 0.0
        %492 = vmatpush1.msra.mxu0 0.0
        %493 = vmatprep.subr.mxu0 0.0
        %494 = vmatpush1.msra.mxu0 0.0
        %495 = vmatprep.subr.mxu0 0.0
        %496 = vmatpush1.msra.mxu0 0.0
        %497 = vmatprep.subr.mxu0 0.0
        %498 = vmatpush1.msra.mxu0 0.0
        %499 = vmatprep.subr.mxu0 0.0
        %500 = vmatpush1.msra.mxu0 0.0
        %501 = vmatprep.subr.mxu0 0.0
        %502 = vmatpush1.msra.mxu0 0.0
        %503 = vmatprep.subr.mxu0 0.0
        %504 = vmatpush1.msra.mxu0 0.0
        %505 = vmatprep.subr.mxu0 0.0
        %506 = vmatpush1.msra.mxu0 0.0
        %507 = vmatprep.subr.mxu0 0.0
        %508 = vmatpush1.msra.mxu0 0.0
        %509 = vmatprep.subr.mxu0 0.0
        %510 = vmatpush1.msra.mxu0 0.0
        %511 = vmatprep.subr.mxu0 0.0
        %512 = vmatpush1.msra.mxu0 0.0
        %513 = vmatprep.subr.mxu0 0.0
        %514 = vmatpush1.msra.mxu0 0.0
        %515 = vmatprep.subr.mxu0 0.0
        %516 = vmatpush1.msra.mxu0 0.0
        %517 = vmatprep.subr.mxu0 0.0
        %518 = vmatpush1.msra.mxu0 0.0
        %519 = vmatprep.subr.mxu0 0.0
        %520 = vmatpush1.msra.mxu0 0.0
        %521 = vmatprep.subr.mxu0 0.0
        %522 = vmatpush1.msra.mxu0 0.0
        %523 = vmatprep.subr.mxu0 0.0
        %524 = vmatpush1.msra.mxu0 0.0
        %525 = vmatprep.subr.mxu0 0.0
        %526 = vmatpush1.msra.mxu0 0.0
        %527 = vmatprep.subr.mxu0 0.0
        %528 = vmatpush1.msra.mxu0 0.0
        %529 = vmatprep.subr.mxu0 0.0
        %530 = vmatpush1.msra.mxu0 0.0
        %531 = vmatprep.subr.mxu0 0.0
        %532 = vmatpush1.msra.mxu0 0.0
        %533 = vmatprep.subr.mxu0 0.0
        %534 = vmatpush1.msra.mxu0 0.0
        %535 = vmatprep.subr.mxu0 0.0
        %536 = vmatpush1.msra.mxu0 0.0
        %537 = vmatprep.subr.mxu0 0.0
        %538 = vmatpush1.msra.mxu0 0.0
        %539 = vmatprep.subr.mxu0 0.0
        %540 = vmatpush1.msra.mxu0 0.0
        %541 = vmatprep.subr.mxu0 0.0
        %542 = vmatpush1.msra.mxu0 0.0
        %543 = vmatprep.subr.mxu0 0.0
        %544 = vmatpush1.msra.mxu0 0.0
        %545 = vmatprep.subr.mxu0 0.0
        %546 = vmatpush1.msra.mxu0 0.0
        %547 = vmatprep.mubr.f32.mxu0 0.0
        %548 = vmatmul.mubr.f32.gmra.mrb[0].mxu0 %v410
        %v549 = vpop.f32.mrb[0].mxu0
        %v550 = vadd.f32 %v379, %v549
        %v551 = vpop.f32.mrb[0].mxu0
        %v552 = vadd.f32 %v383, %v551
        %553 = vdwg.mxu0
        %554 = vmatprep.subr.mxu0 %v339
        %555 = vmatpush1.msra.mxu0 %v338
        %556 = vmatprep.subr.mxu0 %v347
        %557 = vmatpush1.msra.mxu0 %v346
        %558 = vmatprep.subr.mxu0 %v355
        %559 = vmatpush1.msra.mxu0 %v354
        %560 = vmatprep.subr.mxu0 %v363
        %561 = vmatpush1.msra.mxu0 %v362
        %562 = vmatprep.subr.mxu0 0.0
        %563 = vmatpush1.msra.mxu0 0.0
        %564 = vmatprep.subr.mxu0 0.0
        %565 = vmatpush1.msra.mxu0 0.0
        %566 = vmatprep.subr.mxu0 0.0
        %567 = vmatpush1.msra.mxu0 0.0
        %568 = vmatprep.subr.mxu0 0.0
        %569 = vmatpush1.msra.mxu0 0.0
        %570 = vmatprep.subr.mxu0 0.0
        %571 = vmatpush1.msra.mxu0 0.0
        %572 = vmatprep.subr.mxu0 0.0
        %573 = vmatpush1.msra.mxu0 0.0
        %574 = vmatprep.subr.mxu0 0.0
        %575 = vmatpush1.msra.mxu0 0.0
        %576 = vmatprep.subr.mxu0 0.0
        %577 = vmatpush1.msra.mxu0 0.0
        %578 = vmatprep.subr.mxu0 0.0
        %579 = vmatpush1.msra.mxu0 0.0
        %580 = vmatprep.subr.mxu0 0.0
        %581 = vmatpush1.msra.mxu0 0.0
        %582 = vmatprep.subr.mxu0 0.0
        %583 = vmatpush1.msra.mxu0 0.0
        %584 = vmatprep.subr.mxu0 0.0
        %585 = vmatpush1.msra.mxu0 0.0
        %586 = vmatprep.subr.mxu0 0.0
        %587 = vmatpush1.msra.mxu0 0.0
        %588 = vmatprep.subr.mxu0 0.0
        %589 = vmatpush1.msra.mxu0 0.0
        %590 = vmatprep.subr.mxu0 0.0
        %591 = vmatpush1.msra.mxu0 0.0
        %592 = vmatprep.subr.mxu0 0.0
        %593 = vmatpush1.msra.mxu0 0.0
        %594 = vmatprep.subr.mxu0 0.0
        %595 = vmatpush1.msra.mxu0 0.0
        %596 = vmatprep.subr.mxu0 0.0
        %597 = vmatpush1.msra.mxu0 0.0
        %598 = vmatprep.subr.mxu0 0.0
        %599 = vmatpush1.msra.mxu0 0.0
        %600 = vmatprep.subr.mxu0 0.0
        %601 = vmatpush1.msra.mxu0 0.0
        %602 = vmatprep.subr.mxu0 0.0
        %603 = vmatpush1.msra.mxu0 0.0
        %604 = vmatprep.subr.mxu0 0.0
        %605 = vmatpush1.msra.mxu0 0.0
        %606 = vmatprep.subr.mxu0 0.0
        %607 = vmatpush1.msra.mxu0 0.0
        %608 = vmatprep.subr.mxu0 0.0
        %609 = vmatpush1.msra.mxu0 0.0
        %610 = vmatprep.subr.mxu0 0.0
        %611 = vmatpush1.msra.mxu0 0.0
        %612 = vmatprep.subr.mxu0 0.0
        %613 = vmatpush1.msra.mxu0 0.0
        %614 = vmatprep.subr.mxu0 0.0
        %615 = vmatpush1.msra.mxu0 0.0
        %616 = vmatprep.subr.mxu0 0.0
        %617 = vmatpush1.msra.mxu0 0.0
        %618 = vmatprep.mubr.f32.mxu0 0.0
        %619 = vmatmul.mubr.f32.gmra.mrb[0].mxu0 %v410
        %v620 = vpop.f32.mrb[0].mxu0
        %v621 = vadd.f32 %v387, %v620
        %v622 = vpop.f32.mrb[0].mxu0
        %v623 = vadd.f32 %v391, %v622
        %624 = vdwg.mxu0
        %625 = vmatprep.subr.mxu0 %v341
        %626 = vmatpush1.msra.mxu0 %v340
        %627 = vmatprep.subr.mxu0 %v349
        %628 = vmatpush1.msra.mxu0 %v348
        %629 = vmatprep.subr.mxu0 %v357
        %630 = vmatpush1.msra.mxu0 %v356
        %631 = vmatprep.subr.mxu0 %v365
        %632 = vmatpush1.msra.mxu0 %v364
        %633 = vmatprep.subr.mxu0 0.0
        %634 = vmatpush1.msra.mxu0 0.0
        %635 = vmatprep.subr.mxu0 0.0
        %636 = vmatpush1.msra.mxu0 0.0
        %637 = vmatprep.subr.mxu0 0.0
        %638 = vmatpush1.msra.mxu0 0.0
        %639 = vmatprep.subr.mxu0 0.0
        %640 = vmatpush1.msra.mxu0 0.0
        %641 = vmatprep.subr.mxu0 0.0
        %642 = vmatpush1.msra.mxu0 0.0
        %643 = vmatprep.subr.mxu0 0.0
        %644 = vmatpush1.msra.mxu0 0.0
        %645 = vmatprep.subr.mxu0 0.0
        %646 = vmatpush1.msra.mxu0 0.0
        %647 = vmatprep.subr.mxu0 0.0
        %648 = vmatpush1.msra.mxu0 0.0
        %649 = vmatprep.subr.mxu0 0.0
        %650 = vmatpush1.msra.mxu0 0.0
        %651 = vmatprep.subr.mxu0 0.0
        %652 = vmatpush1.msra.mxu0 0.0
        %653 = vmatprep.subr.mxu0 0.0
        %654 = vmatpush1.msra.mxu0 0.0
        %655 = vmatprep.subr.mxu0 0.0
        %656 = vmatpush1.msra.mxu0 0.0
        %657 = vmatprep.subr.mxu0 0.0
        %658 = vmatpush1.msra.mxu0 0.0
        %659 = vmatprep.subr.mxu0 0.0
        %660 = vmatpush1.msra.mxu0 0.0
        %661 = vmatprep.subr.mxu0 0.0
        %662 = vmatpush1.msra.mxu0 0.0
        %663 = vmatprep.subr.mxu0 0.0
        %664 = vmatpush1.msra.mxu0 0.0
        %665 = vmatprep.subr.mxu0 0.0
        %666 = vmatpush1.msra.mxu0 0.0
        %667 = vmatprep.subr.mxu0 0.0
        %668 = vmatpush1.msra.mxu0 0.0
        %669 = vmatprep.subr.mxu0 0.0
        %670 = vmatpush1.msra.mxu0 0.0
        %671 = vmatprep.subr.mxu0 0.0
        %672 = vmatpush1.msra.mxu0 0.0
        %673 = vmatprep.subr.mxu0 0.0
        %674 = vmatpush1.msra.mxu0 0.0
        %675 = vmatprep.subr.mxu0 0.0
        %676 = vmatpush1.msra.mxu0 0.0
        %677 = vmatprep.subr.mxu0 0.0
        %678 = vmatpush1.msra.mxu0 0.0
        %679 = vmatprep.subr.mxu0 0.0
        %680 = vmatpush1.msra.mxu0 0.0
        %681 = vmatprep.subr.mxu0 0.0
        %682 = vmatpush1.msra.mxu0 0.0
        %683 = vmatprep.subr.mxu0 0.0
        %684 = vmatpush1.msra.mxu0 0.0
        %685 = vmatprep.subr.mxu0 0.0
        %686 = vmatpush1.msra.mxu0 0.0
        %687 = vmatprep.subr.mxu0 0.0
        %688 = vmatpush1.msra.mxu0 0.0
        %689 = vmatprep.mubr.f32.mxu0 0.0
        %690 = vmatmul.mubr.f32.gmra.mrb[0].mxu0 %v410
        %v691 = vpop.f32.mrb[0].mxu0
        %v692 = vadd.f32 %v395, %v691
        %v693 = vpop.f32.mrb[0].mxu0
        %v694 = vadd.f32 %v399, %v693
        %695 = vdwg.mxu0
        %v704 = vcombine.low %v479, %v481
        %v705 = vcombine.low %v550, %v552
        %v707 = vunpack.c.l.s4 1983009808
        %v708 = vunpack.c.0.s8 %v707
        %v709 = vlaneseq
        %v710 = vshrl.u32 %v709, 7
        %v711 = vsub.s32 %v708, %v710
        %v712 = vrot.slane %v704, %v711
        %v714 = vunpack.c.l.s4 1983009808
        %v715 = vunpack.c.0.s8 %v714
        %v716 = vlaneseq
        %v717 = vshrl.u32 %v716, 7
        %v718 = vsub.s32 %v715, %v717
        %v719 = vrot.slane %v705, %v718
        %v720 = vcombine.low %v712, %v719
        %v721 = vcombine.low %v621, %v623
        %v722 = vcombine.low %v692, %v694
        %v724 = vunpack.c.l.s4 1983009808
        %v725 = vunpack.c.0.s8 %v724
        %v726 = vlaneseq
        %v727 = vshrl.u32 %v726, 7
        %v728 = vsub.s32 %v725, %v727
        %v729 = vrot.slane %v721, %v728
        %v731 = vunpack.c.l.s4 1983009808
        %v732 = vunpack.c.0.s8 %v731
        %v733 = vlaneseq
        %v734 = vshrl.u32 %v733, 7
        %v735 = vsub.s32 %v732, %v734
        %v736 = vrot.slane %v722, %v735
        %v737 = vcombine.low %v729, %v736
        %740 = vst [vmem:[%s307] sm:$0xff] %v720
        %741 = vst [vmem:[%s307 + $0x8] sm:$0xff] %v737
        %vm742 = vcmask 1041408
        %v743 = vsel %vm742, %v479, -inf
        %v744 = vsel %vm742, %v481, -inf
        %v745 = vsel %vm742, %v550, -inf
        %v746 = vsel %vm742, %v552, -inf
        %v747 = vsel %vm742, %v621, -inf
        %v748 = vmax.f32 %v743, %v747
        %v749 = vsel %vm742, %v623, -inf
        %v750 = vmax.f32 %v744, %v749
        %v751 = vsel %vm742, %v692, -inf
        %v752 = vmax.f32 %v745, %v751
        %v753 = vsel %vm742, %v694, -inf
        %v754 = vmax.f32 %v746, %v753
        %v755 = vmax.f32 %v748, %v750
        %v756 = vmax.f32 %v752, %v754
        %v757 = vmax.f32 %v755, %v756
        %758 = vmax.xlane.f32.xlu0 %v757
        %v759 = vpop.xlane.xlu0 %758
        %vm760 = vcmask 1024
        %761 = vst.msk [vmem:[%s312] sm:$0x3] %vm760, %v759
        %v762 = vsub.f32 %v479, %v759
        %v763 = vsub.f32 %v481, %v759
        %v764 = vsub.f32 %v550, %v759
        %v765 = vsub.f32 %v552, %v759
        %v766 = vsub.f32 %v621, %v759
        %v767 = vsub.f32 %v623, %v759
        %v768 = vsub.f32 %v692, %v759
        %v769 = vsub.f32 %v694, %v759
        %v770 = vmul.f32 %v762, 1.442695
        %v771 = vpow.pop %v770
        %v772 = vmul.f32 %v763, 1.442695
        %v773 = vpow.pop %v772
        %v774 = vmul.f32 %v764, 1.442695
        %v775 = vpow.pop %v774
        %v776 = vmul.f32 %v765, 1.442695
        %v777 = vpow.pop %v776
        %v778 = vmul.f32 %v766, 1.442695
        %v779 = vpow.pop %v778
        %v780 = vmul.f32 %v767, 1.442695
        %v781 = vpow.pop %v780
        %v782 = vmul.f32 %v768, 1.442695
        %v783 = vpow.pop %v782
        %v784 = vmul.f32 %v769, 1.442695
        %v785 = vpow.pop %v784
        %v786 = vsel %vm742, %v771, 0.0
        %v787 = vsel %vm742, %v773, 0.0
        %v788 = vadd.f32 %v786, %v787
        %v789 = vsel %vm742, %v775, 0.0
        %v790 = vadd.f32 %v788, %v789
        %v791 = vsel %vm742, %v777, 0.0
        %v792 = vadd.f32 %v790, %v791
        %v793 = vsel %vm742, %v779, 0.0
        %v794 = vadd.f32 %v792, %v793
        %v795 = vsel %vm742, %v781, 0.0
        %v796 = vadd.f32 %v794, %v795
        %v797 = vsel %vm742, %v783, 0.0
        %v798 = vadd.f32 %v796, %v797
        %v799 = vsel %vm742, %v785, 0.0
        %v800 = vadd.f32 %v798, %v799
        %801 = vadd.xlane.f32.xlu0 %v800
        %v802 = vpop.xlane.xlu0 %801
        %803 = vst.msk [vmem:[%s316] sm:$0x3] %vm760, %v802
        %s804 = smul.u32 8, %s17
        %p805 = scmp.lt.s32.totalorder %s804, 31
        %s806 = scalar_select %p805, %s804, 31
        %s807 = smul.addr %s806, 2
        %s808 = scalar_lea.vmem %s3, %s807
        %p809 = scmp.lt.s32.totalorder %s17, 3
        %s810 = scalar_select %p809, %s17, 3
        %s811 = smul.addr %s810, 2
        %s812 = scalar_lea.vmem %s4, %s811
        %p813 = scmp.lt.s32.totalorder %s17, 3
        %s814 = scalar_select %p813, %s17, 3
        %s815 = smul.addr %s814, 2
        %s816 = scalar_lea.vmem %s5, %s815
        // Predicated region
        $region56: #{_decoder_rnn_forward_impl.3} parent=50 // pred_check
          %p817 = pneg %p108
        $region57: #{_decoder_rnn_forward_impl.3} parent=50 // pred_check_branch
          %819 = sbr.rel (%p817) target = $region59
        $region58: #{_decoder_rnn_forward_impl.3} parent=50 // pred_region
          %s820 = smul.u32 8, %s17
        $region59: #{_decoder_rnn_forward_impl.3} parent=50 // pred_fallthru
          _
        // Predicated region
        $region60: #{_decoder_rnn_forward_impl.3} parent=50 // pred_check
          %p821 = pneg %p134
        $region61: #{_decoder_rnn_forward_impl.3} parent=50 // pred_check_branch
          %823 = sbr.rel (%p821) target = $region63
        $region62: #{_decoder_rnn_forward_impl.3} parent=50 // pred_region
          _
        $region63: #{_decoder_rnn_forward_impl.3} parent=50 // pred_fallthru
          _
        // Predicated region
        $region64: #{_decoder_rnn_forward_impl.3} parent=50 // pred_check
          %p824 = pneg %p160
        $region65: #{_decoder_rnn_forward_impl.3} parent=50 // pred_check_branch
          %826 = sbr.rel (%p824) target = $region67
        $region66: #{_decoder_rnn_forward_impl.3} parent=50 // pred_region
          _
        $region67: #{_decoder_rnn_forward_impl.3} parent=50 // pred_fallthru
          _
      $region51: #{_decoder_rnn_forward_impl.3} parent=5 // pred_fallthru
        _
      %p827 = scmp.le.s32.totalorder 2, %s12
      // Predicated region
      $region68: #{_decoder_rnn_forward_impl.3} parent=5 // pred_check
        %p828 = pneg %p827
      $region69: #{_decoder_rnn_forward_impl.3} parent=5 // pred_check_branch
        %830 = sbr.rel (%p828) target = $region71
      $region70: #{_decoder_rnn_forward_impl.3} parent=5 // pred_region
        %s831 = ssub.s32 %s12, 2
        // Predicated region
        $region72: #{_decoder_rnn_forward_impl.3} parent=70 // pred_check
          %p832 = pneg %p114
        $region73: #{_decoder_rnn_forward_impl.3} parent=70 // pred_check_branch
          %834 = sbr.rel (%p832) target = $region75
        $region74: #{_decoder_rnn_forward_impl.3} parent=70 // pred_region
          %s835 = smul.u32 8, %s18
          %p836 = scmp.lt.s32.totalorder %s835, 31
          %s837 = scalar_select %p836, %s835, 31
          %s838 = smul.addr %s837, 2
          %s839 = scalar_lea.vmem %s3, %s838
        $region75: #{_decoder_rnn_forward_impl.3} parent=70 // pred_fallthru
          _
        // Predicated region
        $region76: #{_decoder_rnn_forward_impl.3} parent=70 // pred_check
          %p840 = pneg %p140
        $region77: #{_decoder_rnn_forward_impl.3} parent=70 // pred_check_branch
          %842 = sbr.rel (%p840) target = $region79
        $region78: #{_decoder_rnn_forward_impl.3} parent=70 // pred_region
          %p843 = scmp.lt.s32.totalorder %s18, 3
          %s844 = scalar_select %p843, %s18, 3
          %s845 = smul.addr %s844, 2
          %s846 = scalar_lea.vmem %s4, %s845
        $region79: #{_decoder_rnn_forward_impl.3} parent=70 // pred_fallthru
          _
        // Predicated region
        $region80: #{_decoder_rnn_forward_impl.3} parent=70 // pred_check
          %p847 = pneg %p166
        $region81: #{_decoder_rnn_forward_impl.3} parent=70 // pred_check_branch
          %849 = sbr.rel (%p847) target = $region83
        $region82: #{_decoder_rnn_forward_impl.3} parent=70 // pred_region
          %p850 = scmp.lt.s32.totalorder %s18, 3
          %s851 = scalar_select %p850, %s18, 3
          %s852 = smul.addr %s851, 2
          %s853 = scalar_lea.vmem %s5, %s852
        $region83: #{_decoder_rnn_forward_impl.3} parent=70 // pred_fallthru
          _
      $region71: #{_decoder_rnn_forward_impl.3} parent=5 // pred_fallthru
        _
    $region6: #{_decoder_rnn_forward_impl.3} parent=1 // loop_footer
      %s16 = sadd.s32 1, %s12
    $region7: #{_decoder_rnn_forward_impl.3} parent=1 // loop_footer_branch
      %11 = sbr.rel target = $region3
    $region8: #{_decoder_rnn_forward_impl.3} parent=1 // loop_exit
      _

</llo_original>
